<compile_context>
chip_gen: v7x
topology: tpu7x:2x2x1
jax: 0.10.0
libtpu: 0.0.40
codegen_flags: <defaults>
</compile_context>

<pallas_src>
import functools

import jax
import jax.numpy as jnp
from jax.experimental import pallas as pl
from jax.experimental.pallas import tpu as pltpu

LANE = 128      # per-gate lane block = one full vreg width
SUBLANE = 8     # padded batch = one full sublane tile


def _gru_fused_kernel(x_ref, wih_ref, whh_ref, b_ref, bhn_ref, wlin_ref, blin_ref,
                      y_ref, *, seq_len, batch_pad):
    T, Bp, L = seq_len, batch_pad, LANE

    x = x_ref[...]                                        # (T*Bp, I), row t*Bp + b == (t, b)

    # ---- Phase 1: ONE fused input projection for all gates & all timesteps.
    # Folded biases (b_r = b_ih_r + b_hh_r, b_z = ..., b_in = b_ih_n) added in the same pass.
    gi = jnp.dot(x, wih_ref[...], preferred_element_type=jnp.float32) + b_ref[...]  # (T*Bp, 3L)

    whh = whh_ref[...]                                    # (L, 3L), rows [H:L] are zero
    b_hn = bhn_ref[...]                                   # (1, L): stays inside r*(...) term

    # ---- Phase 2: serial recurrence, fully unrolled (T static & small); h_t kept in vregs.
    h = jnp.zeros((Bp, L), jnp.float32)                   # h0 = 0, matches GRU.init()
    hs = []
    for t in range(T):
        lo = t * Bp                                       # sublane-aligned (multiple of 8)
        gi_t = gi[lo:lo + Bp, :]                          # (Bp, 3L)
        gh = jnp.dot(h, whh, preferred_element_type=jnp.float32)    # ONE MXU pass / step
        r = jax.nn.sigmoid(gi_t[:, 0:L] + gh[:, 0:L])                    # lane-aligned vreg slices
        z = jax.nn.sigmoid(gi_t[:, L:2 * L] + gh[:, L:2 * L])
        n = jnp.tanh(gi_t[:, 2 * L:3 * L] + r * (gh[:, 2 * L:3 * L] + b_hn))
        h = (1.0 - z) * n + z * h
        hs.append(h)
    # TODO(synk): if T ever becomes large/dynamic, switch to lax.fori_loop(..., unroll=True)
    # with per-step VMEM stores to avoid vreg-pressure blowup from full unrolling.

    # ---- Phase 3: deferred per-timestep Linear; h_all never round-trips through VMEM scratch.
    h_all = jnp.concatenate(hs, axis=0)                   # (T*Bp, L), stays in vregs
    y = jnp.dot(h_all, wlin_ref[...], preferred_element_type=jnp.float32) + blin_ref[...]
    y_ref[...] = y.astype(y_ref.dtype)                    # lane-dense (T*Bp, 128) store


def pack_gru_params(w_ih, w_hh, b_ih, b_hh, w_lin, b_lin):
    """One-time weight packing (call outside the per-step/per-call hot path).

    Gate g (PyTorch order r, z, n) occupies lanes [g*128, g*128+H) of a 3*128-wide
    block; rows of the recurrent / linear weights are zero-padded to 128 so the carried
    hidden state stays a single (8, 128) vreg tile.
    """
    H = w_hh.shape[1]
    I = w_ih.shape[1]
    O = w_lin.shape[0]
    L = LANE
    assert H <= L and O <= L and I <= L, "toy-size packing assumes H, O, I <= 128"

    w_ih = w_ih.astype(jnp.float32)
    w_hh = w_hh.astype(jnp.float32)
    b_ih = b_ih.astype(jnp.float32)
    b_hh = b_hh.astype(jnp.float32)
    w_lin = w_lin.astype(jnp.float32)
    b_lin = b_lin.astype(jnp.float32)

    wih_g = jnp.transpose(w_ih.reshape(3, H, I), (0, 2, 1))     # (3, I, H), gate order r,z,n
    whh_g = jnp.transpose(w_hh.reshape(3, H, H), (0, 2, 1))     # (3, H, H)
    bih_g = b_ih.reshape(3, H)
    bhh_g = b_hh.reshape(3, H)

    def lane_pad(m):                                            # (..., k<=L) -> (..., L)
        return jnp.pad(m, [(0, 0)] * (m.ndim - 1) + [(0, L - m.shape[-1])])

    wih_all = jnp.concatenate([lane_pad(wih_g[g]) for g in range(3)], axis=1)      # (I, 3L)
    whh_all = jnp.concatenate([lane_pad(whh_g[g]) for g in range(3)], axis=1)      # (H, 3L)
    whh_all = jnp.pad(whh_all, ((0, L - H), (0, 0)))                               # (L, 3L)

    b_all = jnp.concatenate([lane_pad((bih_g[0] + bhh_g[0]).reshape(1, H)),
                             lane_pad((bih_g[1] + bhh_g[1]).reshape(1, H)),
                             lane_pad(bih_g[2].reshape(1, H))], axis=1)            # (1, 3L)
    b_hn = lane_pad(bhh_g[2].reshape(1, H))                                        # (1, L)

    wlin_all = jnp.pad(jnp.transpose(w_lin), ((0, L - H), (0, L - O)))             # (L, L)
    blin_all = jnp.pad(b_lin.reshape(1, O), ((0, 0), (0, L - O)))                  # (1, L)

    # TODO(synk): for larger H/B/T on v6e/v7x, also cast matmul operands to bf16 here
    # (keep f32 accumulation / gate math); f32 kept for exact parity at toy size.
    return dict(wih=wih_all, whh=whh_all, b=b_all, b_hn=b_hn,
                wlin=wlin_all, blin=blin_all, hidden=H, out=O)


def gru_forward(x_btf, packed):
    """x_btf: (B, T, I) batch-first, like the PyTorch module. Returns (B, T, O)."""
    B, T, I = x_btf.shape
    O = packed["out"]
    Bp, L = SUBLANE, LANE
    assert B <= Bp

    # Time-major, batch padded to a full sublane tile: row t*Bp + b <-> (t, b).
    x_tb = jnp.transpose(x_btf, (1, 0, 2)).astype(jnp.float32)             # (T, B, I)
    x_pad = jnp.pad(x_tb, ((0, 0), (0, Bp - B), (0, 0))).reshape(T * Bp, I)

    kernel = functools.partial(_gru_fused_kernel, seq_len=T, batch_pad=Bp)

    y_flat = pl.pallas_call(
        kernel,
        out_shape=jax.ShapeDtypeStruct((T * Bp, L), jnp.float32),
        grid_spec=pltpu.PrefetchScalarGridSpec(
            num_scalar_prefetch=0,
            grid=(1,),                                 # single invocation: all VMEM-resident
            in_specs=[
                pl.BlockSpec((T * Bp, I), lambda i: (0, 0)),        # x (time-major, padded)
                pl.BlockSpec((I, 3 * L), lambda i: (0, 0)),         # W_ih^T, gate-per-128-lane
                pl.BlockSpec((L, 3 * L), lambda i: (0, 0)),         # W_hh^T, row/lane padded
                pl.BlockSpec((1, 3 * L), lambda i: (0, 0)),         # folded biases b_r|b_z|b_in
                pl.BlockSpec((1, L), lambda i: (0, 0)),             # b_hh_n
                pl.BlockSpec((L, L), lambda i: (0, 0)),             # W_lin^T padded
                pl.BlockSpec((1, L), lambda i: (0, 0)),             # b_lin padded
            ],
            out_specs=pl.BlockSpec((T * Bp, L), lambda i: (0, 0)),  # lane-dense output
        ),
        compiler_params=pltpu.CompilerParams(
            dimension_semantics=("arbitrary",),
        ),
    )(x_pad, packed["wih"], packed["whh"], packed["b"], packed["b_hn"],
      packed["wlin"], packed["blin"])

    # TODO(synk): remaining wrapper plumbing (x transpose/pad, output slice/transpose) is a
    # handful of tiny XLA ops; if this sits inside a larger jit they fuse away. Weight
    # packing is one-time and outside the per-call path.
    y = y_flat.reshape(T, Bp, L)[:, :B, :O]
    return jnp.transpose(y, (1, 0, 2))                                     # (B, T, O)


def gru_reference(x_btf, w_ih, w_hh, b_ih, b_hh, w_lin, b_lin):
    """Pure-JAX reference of torch.nn.GRU(batch_first=True) + Linear, h0 = 0."""
    B, T, I = x_btf.shape
    H = w_hh.shape[1]

    def step(h, x_t):
        gi = x_t @ w_ih.T + b_ih
        gh = h @ w_hh.T + b_hh
        i_r, i_z, i_n = gi[:, :H], gi[:, H:2 * H], gi[:, 2 * H:]
        h_r, h_z, h_n = gh[:, :H], gh[:, H:2 * H], gh[:, 2 * H:]
        r = jax.nn.sigmoid(i_r + h_r)
        z = jax.nn.sigmoid(i_z + h_z)
        n = jnp.tanh(i_n + r * h_n)
        h_new = (1.0 - z) * n + z * h
        return h_new, h_new

    h0 = jnp.zeros((B, H), jnp.float32)
    _, hs = jax.lax.scan(step, h0, jnp.transpose(x_btf, (1, 0, 2)))  # (T, B, H)
    out = hs @ w_lin.T + b_lin
    return jnp.transpose(out, (1, 0, 2))


if __name__ == "__main__":
    # Module hyperparameters (from params dict): input_size, hidden_size, output_size.
    B, T, I, H, O = 2, 8, 16, 32, 4

    key = jax.random.PRNGKey(0)
    k_ih, k_hh, k_lin, k_x = jax.random.split(key, 4)

    # Deterministic init mirroring the module's `initialization` branch:
    #   xavier_uniform_ on weight_ih_l0 and linear.weight,
    #   orthogonal_ on weight_hh_l0, zero biases.
    w_ih = jax.nn.initializers.glorot_uniform()(k_ih, (3 * H, I), jnp.float32)
    w_hh = jax.nn.initializers.orthogonal()(k_hh, (3 * H, H), jnp.float32)
    b_ih = jnp.zeros((3 * H,), jnp.float32)
    b_hh = jnp.zeros((3 * H,), jnp.float32)
    w_lin = jax.nn.initializers.glorot_uniform()(k_lin, (O, H), jnp.float32)
    b_lin = jnp.zeros((O,), jnp.float32)

    x = jax.random.normal(k_x, (B, T, I), jnp.float32)

    packed = pack_gru_params(w_ih, w_hh, b_ih, b_hh, w_lin, b_lin)   # one-time packing
    y = gru_forward(x, packed)
    y = jax.block_until_ready(y)

    y_ref = gru_reference(x, w_ih, w_hh, b_ih, b_hh, w_lin, b_lin)
    assert y.shape == (B, T, O)
    assert jnp.allclose(y, y_ref, atol=1e-5, rtol=1e-5), "mismatch vs reference"

    print("KERNEL_OK")
</pallas_src>

<mosaic_0001>
module attributes {stable_mosaic.version = 11 : i64} {
  func.func @_gru_fused_kernel(%arg0: i32, %arg1: memref<64x16xf32, #tpu.memory_space<vmem>>, %arg2: memref<16x384xf32, #tpu.memory_space<vmem>>, %arg3: memref<128x384xf32, #tpu.memory_space<vmem>>, %arg4: memref<1x384xf32, #tpu.memory_space<vmem>>, %arg5: memref<1x128xf32, #tpu.memory_space<vmem>>, %arg6: memref<128x128xf32, #tpu.memory_space<vmem>>, %arg7: memref<1x128xf32, #tpu.memory_space<vmem>>, %arg8: memref<64x128xf32, #tpu.memory_space<vmem>>) attributes {dimension_semantics = [#tpu.dimension_semantics<arbitrary>], iteration_bounds = array<i64: 1>, scalar_prefetch = 0 : i64, scratch_operands = 0 : i64, tpu.core_type = #tpu.core_type<tc>, window_params = [{pipeline_mode = #tpu.pipeline_mode<synchronous>, transform_indices = @transform_0, window_bounds = array<i64: 64, 16>}, {pipeline_mode = #tpu.pipeline_mode<synchronous>, transform_indices = @transform_1, window_bounds = array<i64: 16, 384>}, {pipeline_mode = #tpu.pipeline_mode<synchronous>, transform_indices = @transform_2, window_bounds = array<i64: 128, 384>}, {pipeline_mode = #tpu.pipeline_mode<synchronous>, transform_indices = @transform_3, window_bounds = array<i64: 1, 384>}, {pipeline_mode = #tpu.pipeline_mode<synchronous>, transform_indices = @transform_4, window_bounds = array<i64: 1, 128>}, {pipeline_mode = #tpu.pipeline_mode<synchronous>, transform_indices = @transform_5, window_bounds = array<i64: 128, 128>}, {pipeline_mode = #tpu.pipeline_mode<synchronous>, transform_indices = @transform_6, window_bounds = array<i64: 1, 128>}, {pipeline_mode = #tpu.pipeline_mode<synchronous>, transform_indices = @transform_7, window_bounds = array<i64: 64, 128>}]} {
    %c0 = arith.constant 0 : index
    %c0_0 = arith.constant 0 : index
    %0 = vector.load %arg1[%c0, %c0_0] : memref<64x16xf32, #tpu.memory_space<vmem>>, vector<64x16xf32>
    %c0_1 = arith.constant 0 : index
    %c0_2 = arith.constant 0 : index
    %1 = vector.load %arg2[%c0_1, %c0_2] : memref<16x384xf32, #tpu.memory_space<vmem>>, vector<16x384xf32>
    %cst = arith.constant dense<0.000000e+00> : vector<64x384xf32>
    %2 = tpu.matmul %0, %1, %cst {dimension_numbers = #tpu.dot_dimension_numbers<[1], [0], [0], [1], [0, 0, 1, 1], [], []>} : vector<64x16xf32>, vector<16x384xf32>, vector<64x384xf32> -> vector<64x384xf32>
    %c0_3 = arith.constant 0 : index
    %c0_4 = arith.constant 0 : index
    %3 = vector.load %arg4[%c0_3, %c0_4] : memref<1x384xf32, #tpu.memory_space<vmem>>, vector<1x384xf32>
    %4 = vector.broadcast %3 : vector<1x384xf32> to vector<64x384xf32>
    %5 = arith.addf %2, %4 : vector<64x384xf32>
    %c0_5 = arith.constant 0 : index
    %c0_6 = arith.constant 0 : index
    %6 = vector.load %arg3[%c0_5, %c0_6] : memref<128x384xf32, #tpu.memory_space<vmem>>, vector<128x384xf32>
    %c0_7 = arith.constant 0 : index
    %c0_8 = arith.constant 0 : index
    %7 = vector.load %arg5[%c0_7, %c0_8] : memref<1x128xf32, #tpu.memory_space<vmem>>, vector<1x128xf32>
    %cst_9 = arith.constant 0.000000e+00 : f32
    %8 = vector.broadcast %cst_9 : f32 to vector<8x128xf32>
    %9 = vector.extract_strided_slice %5 {offsets = [0, 0], sizes = [8, 384], strides = [1, 1]} : vector<64x384xf32> to vector<8x384xf32>
    %cst_10 = arith.constant dense<0.000000e+00> : vector<8x384xf32>
    %10 = tpu.matmul %8, %6, %cst_10 {dimension_numbers = #tpu.dot_dimension_numbers<[1], [0], [0], [1], [0, 0, 1, 1], [], []>} : vector<8x128xf32>, vector<128x384xf32>, vector<8x384xf32> -> vector<8x384xf32>
    %11 = vector.extract_strided_slice %9 {offsets = [0, 0], sizes = [8, 128], strides = [1, 1]} : vector<8x384xf32> to vector<8x128xf32>
    %12 = vector.extract_strided_slice %10 {offsets = [0, 0], sizes = [8, 128], strides = [1, 1]} : vector<8x384xf32> to vector<8x128xf32>
    %13 = arith.addf %11, %12 : vector<8x128xf32>
    %14 = arith.negf %13 : vector<8x128xf32>
    %15 = math.exp %14 : vector<8x128xf32>
    %cst_11 = arith.constant 1.000000e+00 : f32
    %16 = vector.broadcast %cst_11 : f32 to vector<8x128xf32>
    %17 = arith.addf %16, %15 : vector<8x128xf32>
    %18 = arith.divf %16, %17 : vector<8x128xf32>
    %19 = vector.extract_strided_slice %9 {offsets = [0, 128], sizes = [8, 128], strides = [1, 1]} : vector<8x384xf32> to vector<8x128xf32>
    %20 = vector.extract_strided_slice %10 {offsets = [0, 128], sizes = [8, 128], strides = [1, 1]} : vector<8x384xf32> to vector<8x128xf32>
    %21 = arith.addf %19, %20 : vector<8x128xf32>
    %22 = arith.negf %21 : vector<8x128xf32>
    %23 = math.exp %22 : vector<8x128xf32>
    %cst_12 = arith.constant 1.000000e+00 : f32
    %24 = vector.broadcast %cst_12 : f32 to vector<8x128xf32>
    %25 = arith.addf %24, %23 : vector<8x128xf32>
    %26 = arith.divf %24, %25 : vector<8x128xf32>
    %27 = vector.extract_strided_slice %9 {offsets = [0, 256], sizes = [8, 128], strides = [1, 1]} : vector<8x384xf32> to vector<8x128xf32>
    %28 = vector.extract_strided_slice %10 {offsets = [0, 256], sizes = [8, 128], strides = [1, 1]} : vector<8x384xf32> to vector<8x128xf32>
    %29 = vector.broadcast %7 : vector<1x128xf32> to vector<8x128xf32>
    %30 = arith.addf %28, %29 : vector<8x128xf32>
    %31 = arith.mulf %18, %30 : vector<8x128xf32>
    %32 = arith.addf %27, %31 : vector<8x128xf32>
    %33 = math.tanh %32 : vector<8x128xf32>
    %cst_13 = arith.constant 1.000000e+00 : f32
    %34 = vector.broadcast %cst_13 : f32 to vector<8x128xf32>
    %35 = arith.subf %34, %26 : vector<8x128xf32>
    %36 = arith.mulf %35, %33 : vector<8x128xf32>
    %37 = arith.mulf %26, %8 : vector<8x128xf32>
    %38 = arith.addf %36, %37 : vector<8x128xf32>
    %39 = vector.extract_strided_slice %5 {offsets = [8, 0], sizes = [8, 384], strides = [1, 1]} : vector<64x384xf32> to vector<8x384xf32>
    %cst_14 = arith.constant dense<0.000000e+00> : vector<8x384xf32>
    %40 = tpu.matmul %38, %6, %cst_14 {dimension_numbers = #tpu.dot_dimension_numbers<[1], [0], [0], [1], [0, 0, 1, 1], [], []>} : vector<8x128xf32>, vector<128x384xf32>, vector<8x384xf32> -> vector<8x384xf32>
    %41 = vector.extract_strided_slice %39 {offsets = [0, 0], sizes = [8, 128], strides = [1, 1]} : vector<8x384xf32> to vector<8x128xf32>
    %42 = vector.extract_strided_slice %40 {offsets = [0, 0], sizes = [8, 128], strides = [1, 1]} : vector<8x384xf32> to vector<8x128xf32>
    %43 = arith.addf %41, %42 : vector<8x128xf32>
    %44 = arith.negf %43 : vector<8x128xf32>
    %45 = math.exp %44 : vector<8x128xf32>
    %cst_15 = arith.constant 1.000000e+00 : f32
    %46 = vector.broadcast %cst_15 : f32 to vector<8x128xf32>
    %47 = arith.addf %46, %45 : vector<8x128xf32>
    %48 = arith.divf %46, %47 : vector<8x128xf32>
    %49 = vector.extract_strided_slice %39 {offsets = [0, 128], sizes = [8, 128], strides = [1, 1]} : vector<8x384xf32> to vector<8x128xf32>
    %50 = vector.extract_strided_slice %40 {offsets = [0, 128], sizes = [8, 128], strides = [1, 1]} : vector<8x384xf32> to vector<8x128xf32>
    %51 = arith.addf %49, %50 : vector<8x128xf32>
    %52 = arith.negf %51 : vector<8x128xf32>
    %53 = math.exp %52 : vector<8x128xf32>
    %cst_16 = arith.constant 1.000000e+00 : f32
    %54 = vector.broadcast %cst_16 : f32 to vector<8x128xf32>
    %55 = arith.addf %54, %53 : vector<8x128xf32>
    %56 = arith.divf %54, %55 : vector<8x128xf32>
    %57 = vector.extract_strided_slice %39 {offsets = [0, 256], sizes = [8, 128], strides = [1, 1]} : vector<8x384xf32> to vector<8x128xf32>
    %58 = vector.extract_strided_slice %40 {offsets = [0, 256], sizes = [8, 128], strides = [1, 1]} : vector<8x384xf32> to vector<8x128xf32>
    %59 = vector.broadcast %7 : vector<1x128xf32> to vector<8x128xf32>
    %60 = arith.addf %58, %59 : vector<8x128xf32>
    %61 = arith.mulf %48, %60 : vector<8x128xf32>
    %62 = arith.addf %57, %61 : vector<8x128xf32>
    %63 = math.tanh %62 : vector<8x128xf32>
    %cst_17 = arith.constant 1.000000e+00 : f32
    %64 = vector.broadcast %cst_17 : f32 to vector<8x128xf32>
    %65 = arith.subf %64, %56 : vector<8x128xf32>
    %66 = arith.mulf %65, %63 : vector<8x128xf32>
    %67 = arith.mulf %56, %38 : vector<8x128xf32>
    %68 = arith.addf %66, %67 : vector<8x128xf32>
    %69 = vector.extract_strided_slice %5 {offsets = [16, 0], sizes = [8, 384], strides = [1, 1]} : vector<64x384xf32> to vector<8x384xf32>
    %cst_18 = arith.constant dense<0.000000e+00> : vector<8x384xf32>
    %70 = tpu.matmul %68, %6, %cst_18 {dimension_numbers = #tpu.dot_dimension_numbers<[1], [0], [0], [1], [0, 0, 1, 1], [], []>} : vector<8x128xf32>, vector<128x384xf32>, vector<8x384xf32> -> vector<8x384xf32>
    %71 = vector.extract_strided_slice %69 {offsets = [0, 0], sizes = [8, 128], strides = [1, 1]} : vector<8x384xf32> to vector<8x128xf32>
    %72 = vector.extract_strided_slice %70 {offsets = [0, 0], sizes = [8, 128], strides = [1, 1]} : vector<8x384xf32> to vector<8x128xf32>
    %73 = arith.addf %71, %72 : vector<8x128xf32>
    %74 = arith.negf %73 : vector<8x128xf32>
    %75 = math.exp %74 : vector<8x128xf32>
    %cst_19 = arith.constant 1.000000e+00 : f32
    %76 = vector.broadcast %cst_19 : f32 to vector<8x128xf32>
    %77 = arith.addf %76, %75 : vector<8x128xf32>
    %78 = arith.divf %76, %77 : vector<8x128xf32>
    %79 = vector.extract_strided_slice %69 {offsets = [0, 128], sizes = [8, 128], strides = [1, 1]} : vector<8x384xf32> to vector<8x128xf32>
    %80 = vector.extract_strided_slice %70 {offsets = [0, 128], sizes = [8, 128], strides = [1, 1]} : vector<8x384xf32> to vector<8x128xf32>
    %81 = arith.addf %79, %80 : vector<8x128xf32>
    %82 = arith.negf %81 : vector<8x128xf32>
    %83 = math.exp %82 : vector<8x128xf32>
    %cst_20 = arith.constant 1.000000e+00 : f32
    %84 = vector.broadcast %cst_20 : f32 to vector<8x128xf32>
    %85 = arith.addf %84, %83 : vector<8x128xf32>
    %86 = arith.divf %84, %85 : vector<8x128xf32>
    %87 = vector.extract_strided_slice %69 {offsets = [0, 256], sizes = [8, 128], strides = [1, 1]} : vector<8x384xf32> to vector<8x128xf32>
    %88 = vector.extract_strided_slice %70 {offsets = [0, 256], sizes = [8, 128], strides = [1, 1]} : vector<8x384xf32> to vector<8x128xf32>
    %89 = vector.broadcast %7 : vector<1x128xf32> to vector<8x128xf32>
    %90 = arith.addf %88, %89 : vector<8x128xf32>
    %91 = arith.mulf %78, %90 : vector<8x128xf32>
    %92 = arith.addf %87, %91 : vector<8x128xf32>
    %93 = math.tanh %92 : vector<8x128xf32>
    %cst_21 = arith.constant 1.000000e+00 : f32
    %94 = vector.broadcast %cst_21 : f32 to vector<8x128xf32>
    %95 = arith.subf %94, %86 : vector<8x128xf32>
    %96 = arith.mulf %95, %93 : vector<8x128xf32>
    %97 = arith.mulf %86, %68 : vector<8x128xf32>
    %98 = arith.addf %96, %97 : vector<8x128xf32>
    %99 = vector.extract_strided_slice %5 {offsets = [24, 0], sizes = [8, 384], strides = [1, 1]} : vector<64x384xf32> to vector<8x384xf32>
    %cst_22 = arith.constant dense<0.000000e+00> : vector<8x384xf32>
    %100 = tpu.matmul %98, %6, %cst_22 {dimension_numbers = #tpu.dot_dimension_numbers<[1], [0], [0], [1], [0, 0, 1, 1], [], []>} : vector<8x128xf32>, vector<128x384xf32>, vector<8x384xf32> -> vector<8x384xf32>
    %101 = vector.extract_strided_slice %99 {offsets = [0, 0], sizes = [8, 128], strides = [1, 1]} : vector<8x384xf32> to vector<8x128xf32>
    %102 = vector.extract_strided_slice %100 {offsets = [0, 0], sizes = [8, 128], strides = [1, 1]} : vector<8x384xf32> to vector<8x128xf32>
    %103 = arith.addf %101, %102 : vector<8x128xf32>
    %104 = arith.negf %103 : vector<8x128xf32>
    %105 = math.exp %104 : vector<8x128xf32>
    %cst_23 = arith.constant 1.000000e+00 : f32
    %106 = vector.broadcast %cst_23 : f32 to vector<8x128xf32>
    %107 = arith.addf %106, %105 : vector<8x128xf32>
    %108 = arith.divf %106, %107 : vector<8x128xf32>
    %109 = vector.extract_strided_slice %99 {offsets = [0, 128], sizes = [8, 128], strides = [1, 1]} : vector<8x384xf32> to vector<8x128xf32>
    %110 = vector.extract_strided_slice %100 {offsets = [0, 128], sizes = [8, 128], strides = [1, 1]} : vector<8x384xf32> to vector<8x128xf32>
    %111 = arith.addf %109, %110 : vector<8x128xf32>
    %112 = arith.negf %111 : vector<8x128xf32>
    %113 = math.exp %112 : vector<8x128xf32>
    %cst_24 = arith.constant 1.000000e+00 : f32
    %114 = vector.broadcast %cst_24 : f32 to vector<8x128xf32>
    %115 = arith.addf %114, %113 : vector<8x128xf32>
    %116 = arith.divf %114, %115 : vector<8x128xf32>
    %117 = vector.extract_strided_slice %99 {offsets = [0, 256], sizes = [8, 128], strides = [1, 1]} : vector<8x384xf32> to vector<8x128xf32>
    %118 = vector.extract_strided_slice %100 {offsets = [0, 256], sizes = [8, 128], strides = [1, 1]} : vector<8x384xf32> to vector<8x128xf32>
    %119 = vector.broadcast %7 : vector<1x128xf32> to vector<8x128xf32>
    %120 = arith.addf %118, %119 : vector<8x128xf32>
    %121 = arith.mulf %108, %120 : vector<8x128xf32>
    %122 = arith.addf %117, %121 : vector<8x128xf32>
    %123 = math.tanh %122 : vector<8x128xf32>
    %cst_25 = arith.constant 1.000000e+00 : f32
    %124 = vector.broadcast %cst_25 : f32 to vector<8x128xf32>
    %125 = arith.subf %124, %116 : vector<8x128xf32>
    %126 = arith.mulf %125, %123 : vector<8x128xf32>
    %127 = arith.mulf %116, %98 : vector<8x128xf32>
    %128 = arith.addf %126, %127 : vector<8x128xf32>
    %129 = vector.extract_strided_slice %5 {offsets = [32, 0], sizes = [8, 384], strides = [1, 1]} : vector<64x384xf32> to vector<8x384xf32>
    %cst_26 = arith.constant dense<0.000000e+00> : vector<8x384xf32>
    %130 = tpu.matmul %128, %6, %cst_26 {dimension_numbers = #tpu.dot_dimension_numbers<[1], [0], [0], [1], [0, 0, 1, 1], [], []>} : vector<8x128xf32>, vector<128x384xf32>, vector<8x384xf32> -> vector<8x384xf32>
    %131 = vector.extract_strided_slice %129 {offsets = [0, 0], sizes = [8, 128], strides = [1, 1]} : vector<8x384xf32> to vector<8x128xf32>
    %132 = vector.extract_strided_slice %130 {offsets = [0, 0], sizes = [8, 128], strides = [1, 1]} : vector<8x384xf32> to vector<8x128xf32>
    %133 = arith.addf %131, %132 : vector<8x128xf32>
    %134 = arith.negf %133 : vector<8x128xf32>
    %135 = math.exp %134 : vector<8x128xf32>
    %cst_27 = arith.constant 1.000000e+00 : f32
    %136 = vector.broadcast %cst_27 : f32 to vector<8x128xf32>
    %137 = arith.addf %136, %135 : vector<8x128xf32>
    %138 = arith.divf %136, %137 : vector<8x128xf32>
    %139 = vector.extract_strided_slice %129 {offsets = [0, 128], sizes = [8, 128], strides = [1, 1]} : vector<8x384xf32> to vector<8x128xf32>
    %140 = vector.extract_strided_slice %130 {offsets = [0, 128], sizes = [8, 128], strides = [1, 1]} : vector<8x384xf32> to vector<8x128xf32>
    %141 = arith.addf %139, %140 : vector<8x128xf32>
    %142 = arith.negf %141 : vector<8x128xf32>
    %143 = math.exp %142 : vector<8x128xf32>
    %cst_28 = arith.constant 1.000000e+00 : f32
    %144 = vector.broadcast %cst_28 : f32 to vector<8x128xf32>
    %145 = arith.addf %144, %143 : vector<8x128xf32>
    %146 = arith.divf %144, %145 : vector<8x128xf32>
    %147 = vector.extract_strided_slice %129 {offsets = [0, 256], sizes = [8, 128], strides = [1, 1]} : vector<8x384xf32> to vector<8x128xf32>
    %148 = vector.extract_strided_slice %130 {offsets = [0, 256], sizes = [8, 128], strides = [1, 1]} : vector<8x384xf32> to vector<8x128xf32>
    %149 = vector.broadcast %7 : vector<1x128xf32> to vector<8x128xf32>
    %150 = arith.addf %148, %149 : vector<8x128xf32>
    %151 = arith.mulf %138, %150 : vector<8x128xf32>
    %152 = arith.addf %147, %151 : vector<8x128xf32>
    %153 = math.tanh %152 : vector<8x128xf32>
    %cst_29 = arith.constant 1.000000e+00 : f32
    %154 = vector.broadcast %cst_29 : f32 to vector<8x128xf32>
    %155 = arith.subf %154, %146 : vector<8x128xf32>
    %156 = arith.mulf %155, %153 : vector<8x128xf32>
    %157 = arith.mulf %146, %128 : vector<8x128xf32>
    %158 = arith.addf %156, %157 : vector<8x128xf32>
    %159 = vector.extract_strided_slice %5 {offsets = [40, 0], sizes = [8, 384], strides = [1, 1]} : vector<64x384xf32> to vector<8x384xf32>
    %cst_30 = arith.constant dense<0.000000e+00> : vector<8x384xf32>
    %160 = tpu.matmul %158, %6, %cst_30 {dimension_numbers = #tpu.dot_dimension_numbers<[1], [0], [0], [1], [0, 0, 1, 1], [], []>} : vector<8x128xf32>, vector<128x384xf32>, vector<8x384xf32> -> vector<8x384xf32>
    %161 = vector.extract_strided_slice %159 {offsets = [0, 0], sizes = [8, 128], strides = [1, 1]} : vector<8x384xf32> to vector<8x128xf32>
    %162 = vector.extract_strided_slice %160 {offsets = [0, 0], sizes = [8, 128], strides = [1, 1]} : vector<8x384xf32> to vector<8x128xf32>
    %163 = arith.addf %161, %162 : vector<8x128xf32>
    %164 = arith.negf %163 : vector<8x128xf32>
    %165 = math.exp %164 : vector<8x128xf32>
    %cst_31 = arith.constant 1.000000e+00 : f32
    %166 = vector.broadcast %cst_31 : f32 to vector<8x128xf32>
    %167 = arith.addf %166, %165 : vector<8x128xf32>
    %168 = arith.divf %166, %167 : vector<8x128xf32>
    %169 = vector.extract_strided_slice %159 {offsets = [0, 128], sizes = [8, 128], strides = [1, 1]} : vector<8x384xf32> to vector<8x128xf32>
    %170 = vector.extract_strided_slice %160 {offsets = [0, 128], sizes = [8, 128], strides = [1, 1]} : vector<8x384xf32> to vector<8x128xf32>
    %171 = arith.addf %169, %170 : vector<8x128xf32>
    %172 = arith.negf %171 : vector<8x128xf32>
    %173 = math.exp %172 : vector<8x128xf32>
    %cst_32 = arith.constant 1.000000e+00 : f32
    %174 = vector.broadcast %cst_32 : f32 to vector<8x128xf32>
    %175 = arith.addf %174, %173 : vector<8x128xf32>
    %176 = arith.divf %174, %175 : vector<8x128xf32>
    %177 = vector.extract_strided_slice %159 {offsets = [0, 256], sizes = [8, 128], strides = [1, 1]} : vector<8x384xf32> to vector<8x128xf32>
    %178 = vector.extract_strided_slice %160 {offsets = [0, 256], sizes = [8, 128], strides = [1, 1]} : vector<8x384xf32> to vector<8x128xf32>
    %179 = vector.broadcast %7 : vector<1x128xf32> to vector<8x128xf32>
    %180 = arith.addf %178, %179 : vector<8x128xf32>
    %181 = arith.mulf %168, %180 : vector<8x128xf32>
    %182 = arith.addf %177, %181 : vector<8x128xf32>
    %183 = math.tanh %182 : vector<8x128xf32>
    %cst_33 = arith.constant 1.000000e+00 : f32
    %184 = vector.broadcast %cst_33 : f32 to vector<8x128xf32>
    %185 = arith.subf %184, %176 : vector<8x128xf32>
    %186 = arith.mulf %185, %183 : vector<8x128xf32>
    %187 = arith.mulf %176, %158 : vector<8x128xf32>
    %188 = arith.addf %186, %187 : vector<8x128xf32>
    %189 = vector.extract_strided_slice %5 {offsets = [48, 0], sizes = [8, 384], strides = [1, 1]} : vector<64x384xf32> to vector<8x384xf32>
    %cst_34 = arith.constant dense<0.000000e+00> : vector<8x384xf32>
    %190 = tpu.matmul %188, %6, %cst_34 {dimension_numbers = #tpu.dot_dimension_numbers<[1], [0], [0], [1], [0, 0, 1, 1], [], []>} : vector<8x128xf32>, vector<128x384xf32>, vector<8x384xf32> -> vector<8x384xf32>
    %191 = vector.extract_strided_slice %189 {offsets = [0, 0], sizes = [8, 128], strides = [1, 1]} : vector<8x384xf32> to vector<8x128xf32>
    %192 = vector.extract_strided_slice %190 {offsets = [0, 0], sizes = [8, 128], strides = [1, 1]} : vector<8x384xf32> to vector<8x128xf32>
    %193 = arith.addf %191, %192 : vector<8x128xf32>
    %194 = arith.negf %193 : vector<8x128xf32>
    %195 = math.exp %194 : vector<8x128xf32>
    %cst_35 = arith.constant 1.000000e+00 : f32
    %196 = vector.broadcast %cst_35 : f32 to vector<8x128xf32>
    %197 = arith.addf %196, %195 : vector<8x128xf32>
    %198 = arith.divf %196, %197 : vector<8x128xf32>
    %199 = vector.extract_strided_slice %189 {offsets = [0, 128], sizes = [8, 128], strides = [1, 1]} : vector<8x384xf32> to vector<8x128xf32>
    %200 = vector.extract_strided_slice %190 {offsets = [0, 128], sizes = [8, 128], strides = [1, 1]} : vector<8x384xf32> to vector<8x128xf32>
    %201 = arith.addf %199, %200 : vector<8x128xf32>
    %202 = arith.negf %201 : vector<8x128xf32>
    %203 = math.exp %202 : vector<8x128xf32>
    %cst_36 = arith.constant 1.000000e+00 : f32
    %204 = vector.broadcast %cst_36 : f32 to vector<8x128xf32>
    %205 = arith.addf %204, %203 : vector<8x128xf32>
    %206 = arith.divf %204, %205 : vector<8x128xf32>
    %207 = vector.extract_strided_slice %189 {offsets = [0, 256], sizes = [8, 128], strides = [1, 1]} : vector<8x384xf32> to vector<8x128xf32>
    %208 = vector.extract_strided_slice %190 {offsets = [0, 256], sizes = [8, 128], strides = [1, 1]} : vector<8x384xf32> to vector<8x128xf32>
    %209 = vector.broadcast %7 : vector<1x128xf32> to vector<8x128xf32>
    %210 = arith.addf %208, %209 : vector<8x128xf32>
    %211 = arith.mulf %198, %210 : vector<8x128xf32>
    %212 = arith.addf %207, %211 : vector<8x128xf32>
    %213 = math.tanh %212 : vector<8x128xf32>
    %cst_37 = arith.constant 1.000000e+00 : f32
    %214 = vector.broadcast %cst_37 : f32 to vector<8x128xf32>
    %215 = arith.subf %214, %206 : vector<8x128xf32>
    %216 = arith.mulf %215, %213 : vector<8x128xf32>
    %217 = arith.mulf %206, %188 : vector<8x128xf32>
    %218 = arith.addf %216, %217 : vector<8x128xf32>
    %219 = vector.extract_strided_slice %5 {offsets = [56, 0], sizes = [8, 384], strides = [1, 1]} : vector<64x384xf32> to vector<8x384xf32>
    %cst_38 = arith.constant dense<0.000000e+00> : vector<8x384xf32>
    %220 = tpu.matmul %218, %6, %cst_38 {dimension_numbers = #tpu.dot_dimension_numbers<[1], [0], [0], [1], [0, 0, 1, 1], [], []>} : vector<8x128xf32>, vector<128x384xf32>, vector<8x384xf32> -> vector<8x384xf32>
    %221 = vector.extract_strided_slice %219 {offsets = [0, 0], sizes = [8, 128], strides = [1, 1]} : vector<8x384xf32> to vector<8x128xf32>
    %222 = vector.extract_strided_slice %220 {offsets = [0, 0], sizes = [8, 128], strides = [1, 1]} : vector<8x384xf32> to vector<8x128xf32>
    %223 = arith.addf %221, %222 : vector<8x128xf32>
    %224 = arith.negf %223 : vector<8x128xf32>
    %225 = math.exp %224 : vector<8x128xf32>
    %cst_39 = arith.constant 1.000000e+00 : f32
    %226 = vector.broadcast %cst_39 : f32 to vector<8x128xf32>
    %227 = arith.addf %226, %225 : vector<8x128xf32>
    %228 = arith.divf %226, %227 : vector<8x128xf32>
    %229 = vector.extract_strided_slice %219 {offsets = [0, 128], sizes = [8, 128], strides = [1, 1]} : vector<8x384xf32> to vector<8x128xf32>
    %230 = vector.extract_strided_slice %220 {offsets = [0, 128], sizes = [8, 128], strides = [1, 1]} : vector<8x384xf32> to vector<8x128xf32>
    %231 = arith.addf %229, %230 : vector<8x128xf32>
    %232 = arith.negf %231 : vector<8x128xf32>
    %233 = math.exp %232 : vector<8x128xf32>
    %cst_40 = arith.constant 1.000000e+00 : f32
    %234 = vector.broadcast %cst_40 : f32 to vector<8x128xf32>
    %235 = arith.addf %234, %233 : vector<8x128xf32>
    %236 = arith.divf %234, %235 : vector<8x128xf32>
    %237 = vector.extract_strided_slice %219 {offsets = [0, 256], sizes = [8, 128], strides = [1, 1]} : vector<8x384xf32> to vector<8x128xf32>
    %238 = vector.extract_strided_slice %220 {offsets = [0, 256], sizes = [8, 128], strides = [1, 1]} : vector<8x384xf32> to vector<8x128xf32>
    %239 = vector.broadcast %7 : vector<1x128xf32> to vector<8x128xf32>
    %240 = arith.addf %238, %239 : vector<8x128xf32>
    %241 = arith.mulf %228, %240 : vector<8x128xf32>
    %242 = arith.addf %237, %241 : vector<8x128xf32>
    %243 = math.tanh %242 : vector<8x128xf32>
    %cst_41 = arith.constant 1.000000e+00 : f32
    %244 = vector.broadcast %cst_41 : f32 to vector<8x128xf32>
    %245 = arith.subf %244, %236 : vector<8x128xf32>
    %246 = arith.mulf %245, %243 : vector<8x128xf32>
    %247 = arith.mulf %236, %218 : vector<8x128xf32>
    %248 = arith.addf %246, %247 : vector<8x128xf32>
    %249 = tpu.concatenate %38, %68, %98, %128, %158, %188, %218, %248 in 0 : vector<8x128xf32>, vector<8x128xf32>, vector<8x128xf32>, vector<8x128xf32>, vector<8x128xf32>, vector<8x128xf32>, vector<8x128xf32>, vector<8x128xf32> -> vector<64x128xf32>
    %c0_42 = arith.constant 0 : index
    %c0_43 = arith.constant 0 : index
    %250 = vector.load %arg6[%c0_42, %c0_43] : memref<128x128xf32, #tpu.memory_space<vmem>>, vector<128x128xf32>
    %cst_44 = arith.constant dense<0.000000e+00> : vector<64x128xf32>
    %251 = tpu.matmul %249, %250, %cst_44 {dimension_numbers = #tpu.dot_dimension_numbers<[1], [0], [0], [1], [0, 0, 1, 1], [], []>} : vector<64x128xf32>, vector<128x128xf32>, vector<64x128xf32> -> vector<64x128xf32>
    %c0_45 = arith.constant 0 : index
    %c0_46 = arith.constant 0 : index
    %252 = vector.load %arg7[%c0_45, %c0_46] : memref<1x128xf32, #tpu.memory_space<vmem>>, vector<1x128xf32>
    %253 = vector.broadcast %252 : vector<1x128xf32> to vector<64x128xf32>
    %254 = arith.addf %251, %253 : vector<64x128xf32>
    %c0_47 = arith.constant 0 : index
    %c0_48 = arith.constant 0 : index
    %255 = vector.load %arg8[%c0_47, %c0_48] : memref<64x128xf32, #tpu.memory_space<vmem>>, vector<64x128xf32>
    tpu.vector_store %arg8[%c0_47, %c0_48], %254 {strides = array<i32>} : memref<64x128xf32, #tpu.memory_space<vmem>>, vector<64x128xf32>,
    return
  }
  func.func @transform_0(%arg0: i32) -> (i32, i32) {
    %c0_i32 = arith.constant 0 : i32
    %c0_i32_0 = arith.constant 0 : i32
    %c0_i32_1 = arith.constant 0 : i32
    return %c0_i32, %c0_i32_0 : i32, i32
  }
  func.func @transform_1(%arg0: i32) -> (i32, i32) {
    %c0_i32 = arith.constant 0 : i32
    %c0_i32_0 = arith.constant 0 : i32
    %c0_i32_1 = arith.constant 0 : i32
    return %c0_i32, %c0_i32_0 : i32, i32
  }
  func.func @transform_2(%arg0: i32) -> (i32, i32) {
    %c0_i32 = arith.constant 0 : i32
    %c0_i32_0 = arith.constant 0 : i32
    %c0_i32_1 = arith.constant 0 : i32
    return %c0_i32, %c0_i32_0 : i32, i32
  }
  func.func @transform_3(%arg0: i32) -> (i32, i32) {
    %c0_i32 = arith.constant 0 : i32
    %c0_i32_0 = arith.constant 0 : i32
    %c0_i32_1 = arith.constant 0 : i32
    return %c0_i32, %c0_i32_0 : i32, i32
  }
  func.func @transform_4(%arg0: i32) -> (i32, i32) {
    %c0_i32 = arith.constant 0 : i32
    %c0_i32_0 = arith.constant 0 : i32
    %c0_i32_1 = arith.constant 0 : i32
    return %c0_i32, %c0_i32_0 : i32, i32
  }
  func.func @transform_5(%arg0: i32) -> (i32, i32) {
    %c0_i32 = arith.constant 0 : i32
    %c0_i32_0 = arith.constant 0 : i32
    %c0_i32_1 = arith.constant 0 : i32
    return %c0_i32, %c0_i32_0 : i32, i32
  }
  func.func @transform_6(%arg0: i32) -> (i32, i32) {
    %c0_i32 = arith.constant 0 : i32
    %c0_i32_0 = arith.constant 0 : i32
    %c0_i32_1 = arith.constant 0 : i32
    return %c0_i32, %c0_i32_0 : i32, i32
  }
  func.func @transform_7(%arg0: i32) -> (i32, i32) {
    %c0_i32 = arith.constant 0 : i32
    %c0_i32_0 = arith.constant 0 : i32
    %c0_i32_1 = arith.constant 0 : i32
    return %c0_i32, %c0_i32_0 : i32, i32
  }
}

</mosaic_0001>

<llo_original>
// kernel: tpu_custom_call.1
$region0: #{tpu_custom_call.1}
  #allocation0 [shape = 'u32[]', space=smem, size = 0x4, offset = 0x4, fixed_abs, tag = 'smem constant byte address 0x4 - core index']
  #allocation1 [shape = 'u32[144,128]{1,0:T(1,128)}', space=vmem, size = 0x12000, scoped, tag = 'internal scratch']
  %s0 = inlined_call_operand.vmem [shape: f32[64,16], index: 0, kind: input, shape index: {}]
  %s1 = inlined_call_operand.vmem [shape: f32[16,384], index: 1, kind: input, shape index: {}]
  %s2 = inlined_call_operand.hbm [shape: f32[128,384], index: 2, kind: input, shape index: {}]
  %s3 = inlined_call_operand.vmem [shape: f32[1,384], index: 3, kind: input, shape index: {}]
  %s4 = inlined_call_operand.vmem [shape: f32[1,128], index: 4, kind: input, shape index: {}]
  %s5 = inlined_call_operand.hbm [shape: f32[128,128], index: 5, kind: input, shape index: {}]
  %s6 = inlined_call_operand.vmem [shape: f32[1,128], index: 6, kind: input, shape index: {}]
  %s7 = inlined_call_operand.hbm [shape: f32[64,128], index: 7, kind: output, shape index: {}]
  %s8 = sld [smem:[#allocation0]]
  $region46: #{tpu_custom_call.1} parent=0
    _
  %s10 = ssub.s32 1, %s8
  %s11 = scalar_select 0, %s10, %s8
  $region1: #{tpu_custom_call.1} parent=0
    #allocation2 [shape = 'u8[196608]{0}', space=vmem, size = 0x30000, scoped, tag = 'input window, operand 2, single buffered']
    #allocation3 [shape = 's32[1]{0}', space=sflag, size = 0x4, scoped, tag = 'scoped memory for tpu_custom_call.1']
    #allocation4 [shape = 's32[1]{0}', space=sflag, size = 0x4, scoped, tag = 'scoped memory for tpu_custom_call.1']
    #allocation5 [shape = 'u8[65536]{0}', space=vmem, size = 0x10000, scoped, tag = 'input window, operand 5, single buffered']
    #allocation6 [shape = 's32[1]{0}', space=sflag, size = 0x4, scoped, tag = 'scoped memory for tpu_custom_call.1']
    #allocation7 [shape = 'u8[32768]{0}', space=vmem, size = 0x8000, scoped, tag = 'output window, operand 0, single buffered']
    %12 = vsyncpa [#allocation3], 0
    %13 = vsyncpa [#allocation6], 0
    %14 = vsyncpa [#allocation4], 0
    // Predicated region
    $region2: #{tpu_custom_call.1} parent=1 // pred_check
      _
    $region3: #{tpu_custom_call.1} parent=1 // pred_check_branch
      %16 = sbr.rel (0) target = $region5
    $region4: #{tpu_custom_call.1} parent=1 // pred_region
      _
    $region5: #{tpu_custom_call.1} parent=1 // pred_fallthru
      _
    // Predicated region
    $region6: #{tpu_custom_call.1} parent=1 // pred_check
      _
    $region7: #{tpu_custom_call.1} parent=1 // pred_check_branch
      %18 = sbr.rel (0) target = $region9
    $region8: #{tpu_custom_call.1} parent=1 // pred_region
      _
    $region9: #{tpu_custom_call.1} parent=1 // pred_fallthru
      _
    // Predicated region
    $region10: #{tpu_custom_call.1} parent=1 // pred_check
      _
    $region11: #{tpu_custom_call.1} parent=1 // pred_check_branch
      %20 = sbr.rel (0) target = $region13
    $region12: #{tpu_custom_call.1} parent=1 // pred_region
      %s22 = ssub.s32 6144, 6144
      %23 = vsyncadd [#allocation3], %s22
      %s24 = sshll.u32 [#allocation2], 4
      %s25 = int_to_ptr.vmem [resolvable:$true] %s24
      %30 = dma.hbm_to_vmem [thread:$0]  %s2, 6144, %s25, [#allocation3], 384, 384, 24
    $region13: #{tpu_custom_call.1} parent=1 // pred_fallthru
      _
    // Predicated region
    $region14: #{tpu_custom_call.1} parent=1 // pred_check
      _
    $region15: #{tpu_custom_call.1} parent=1 // pred_check_branch
      %32 = sbr.rel (0) target = $region17
    $region16: #{tpu_custom_call.1} parent=1 // pred_region
      _
    $region17: #{tpu_custom_call.1} parent=1 // pred_fallthru
      _
    // Predicated region
    $region18: #{tpu_custom_call.1} parent=1 // pred_check
      _
    $region19: #{tpu_custom_call.1} parent=1 // pred_check_branch
      %34 = sbr.rel (0) target = $region21
    $region20: #{tpu_custom_call.1} parent=1 // pred_region
      _
    $region21: #{tpu_custom_call.1} parent=1 // pred_fallthru
      _
    // Predicated region
    $region22: #{tpu_custom_call.1} parent=1 // pred_check
      _
    $region23: #{tpu_custom_call.1} parent=1 // pred_check_branch
      %36 = sbr.rel (0) target = $region25
    $region24: #{tpu_custom_call.1} parent=1 // pred_region
      %s38 = ssub.s32 2048, 2048
      %39 = vsyncadd [#allocation6], %s38
      %s40 = sshll.u32 [#allocation5], 4
      %s41 = int_to_ptr.vmem [resolvable:$true] %s40
      %46 = dma.hbm_to_vmem [thread:$0]  %s5, 2048, %s41, [#allocation6], 128, 128, 8
    $region25: #{tpu_custom_call.1} parent=1 // pred_fallthru
      _
    // Predicated region
    $region26: #{tpu_custom_call.1} parent=1 // pred_check
      _
    $region27: #{tpu_custom_call.1} parent=1 // pred_check_branch
      %48 = sbr.rel (0) target = $region29
    $region28: #{tpu_custom_call.1} parent=1 // pred_region
      _
    $region29: #{tpu_custom_call.1} parent=1 // pred_fallthru
      _
    // Predicated region
    $region30: #{tpu_custom_call.1} parent=1 // pred_check
      _
    $region31: #{tpu_custom_call.1} parent=1 // pred_check_branch
      %50 = sbr.rel (0) target = $region33
    $region32: #{tpu_custom_call.1} parent=1 // pred_region
      %51 = dma.done [#allocation3], 6144
    $region33: #{tpu_custom_call.1} parent=1 // pred_fallthru
      _
    // Predicated region
    $region34: #{tpu_custom_call.1} parent=1 // pred_check
      _
    $region35: #{tpu_custom_call.1} parent=1 // pred_check_branch
      %53 = sbr.rel (0) target = $region37
    $region36: #{tpu_custom_call.1} parent=1 // pred_region
      %54 = dma.done [#allocation6], 2048
    $region37: #{tpu_custom_call.1} parent=1 // pred_fallthru
      _
    %v55 = vld [vmem:[%s0] sm:$0xff]
    %v56 = vld [vmem:[%s0 + $0x8] sm:$0xff]
    %v57 = vld [vmem:[%s0 + $0x10] sm:$0xff]
    %v58 = vld [vmem:[%s0 + $0x18] sm:$0xff]
    %v59 = vld [vmem:[%s0 + $0x20] sm:$0xff]
    %v60 = vld [vmem:[%s0 + $0x28] sm:$0xff]
    %v61 = vld [vmem:[%s0 + $0x30] sm:$0xff]
    %v62 = vld [vmem:[%s0 + $0x38] sm:$0xff]
    %v63 = vld [vmem:[%s1] sm:$0xff]
    %v64 = vld [vmem:[%s1 + $0x8] sm:$0xff]
    %v65 = vld [vmem:[%s1 + $0x10] sm:$0xff]
    %v66 = vld [vmem:[%s1 + $0x18] sm:$0xff]
    %v67 = vld [vmem:[%s1 + $0x20] sm:$0xff]
    %v68 = vld [vmem:[%s1 + $0x28] sm:$0xff]
    %v69 = vld [vmem:[%s3] sm:$0x7]
    %v71 = vlaneseq
    %v72 = vshrl.u32 %v71, 7
    %v73 = vsub.s32 0, %v72
    %v74 = vrot.slane %v69, %v73
    %v75 = vlaneseq
    %v76 = vshrl.u32 %v75, 7
    %v77 = vsub.s32 1, %v76
    %v78 = vrot.slane %v69, %v77
    %v79 = vlaneseq
    %v80 = vshrl.u32 %v79, 7
    %v81 = vsub.s32 2, %v80
    %v82 = vrot.slane %v69, %v81
    %vm86 = vcmask 130048
    %v88 = vsel %vm86, %v55, 0
    %v91 = vsel %vm86, %v56, 0
    %v94 = vsel %vm86, %v57, 0
    %v97 = vsel %vm86, %v58, 0
    %v100 = vsel %vm86, %v59, 0
    %v103 = vsel %vm86, %v60, 0
    %v106 = vsel %vm86, %v61, 0
    %v109 = vsel %vm86, %v62, 0
    %111 = vmatprep.subr.mxu0 %v64
    %112 = vmatpush1.msra.mxu0 %v63
    %113 = vmatprep.subr.mxu0 %v67
    %114 = vmatpush1.msra.mxu0 %v66
    %115 = vmatprep.subr.mxu0 0.0
    %116 = vmatpush1.msra.mxu0 0.0
    %117 = vmatprep.subr.mxu0 0.0
    %118 = vmatpush1.msra.mxu0 0.0
    %119 = vmatprep.subr.mxu0 0.0
    %120 = vmatpush1.msra.mxu0 0.0
    %121 = vmatprep.subr.mxu0 0.0
    %122 = vmatpush1.msra.mxu0 0.0
    %123 = vmatprep.subr.mxu0 0.0
    %124 = vmatpush1.msra.mxu0 0.0
    %125 = vmatprep.subr.mxu0 0.0
    %126 = vmatpush1.msra.mxu0 0.0
    %127 = vmatprep.subr.mxu0 0.0
    %128 = vmatpush1.msra.mxu0 0.0
    %129 = vmatprep.subr.mxu0 0.0
    %130 = vmatpush1.msra.mxu0 0.0
    %131 = vmatprep.subr.mxu0 0.0
    %132 = vmatpush1.msra.mxu0 0.0
    %133 = vmatprep.subr.mxu0 0.0
    %134 = vmatpush1.msra.mxu0 0.0
    %135 = vmatprep.subr.mxu0 0.0
    %136 = vmatpush1.msra.mxu0 0.0
    %137 = vmatprep.subr.mxu0 0.0
    %138 = vmatpush1.msra.mxu0 0.0
    %139 = vmatprep.subr.mxu0 0.0
    %140 = vmatpush1.msra.mxu0 0.0
    %141 = vmatprep.subr.mxu0 0.0
    %142 = vmatpush1.msra.mxu0 0.0
    %143 = vmatprep.subr.mxu0 0.0
    %144 = vmatpush1.msra.mxu0 0.0
    %145 = vmatprep.subr.mxu0 0.0
    %146 = vmatpush1.msra.mxu0 0.0
    %147 = vmatprep.subr.mxu0 0.0
    %148 = vmatpush1.msra.mxu0 0.0
    %149 = vmatprep.subr.mxu0 0.0
    %150 = vmatpush1.msra.mxu0 0.0
    %151 = vmatprep.subr.mxu0 0.0
    %152 = vmatpush1.msra.mxu0 0.0
    %153 = vmatprep.subr.mxu0 0.0
    %154 = vmatpush1.msra.mxu0 0.0
    %155 = vmatprep.subr.mxu0 0.0
    %156 = vmatpush1.msra.mxu0 0.0
    %157 = vmatprep.subr.mxu0 0.0
    %158 = vmatpush1.msra.mxu0 0.0
    %159 = vmatprep.subr.mxu0 0.0
    %160 = vmatpush1.msra.mxu0 0.0
    %161 = vmatprep.subr.mxu0 0.0
    %162 = vmatpush1.msra.mxu0 0.0
    %163 = vmatprep.subr.mxu0 0.0
    %164 = vmatpush1.msra.mxu0 0.0
    %165 = vmatprep.subr.mxu0 0.0
    %166 = vmatpush1.msra.mxu0 0.0
    %167 = vmatprep.subr.mxu0 0.0
    %168 = vmatpush1.msra.mxu0 0.0
    %169 = vmatprep.subr.mxu0 0.0
    %170 = vmatpush1.msra.mxu0 0.0
    %171 = vmatprep.subr.mxu0 0.0
    %172 = vmatpush1.msra.mxu0 0.0
    %173 = vmatprep.subr.mxu0 0.0
    %174 = vmatpush1.msra.mxu0 0.0
    %175 = vmatprep.mubr.f32.mxu0 0.0
    %176 = vmatmul.mubr.f32.gmra.mrb[0].mxu0 %v88
    %v177 = vpop.f32.mrb[0].mxu0
    %v178 = vadd.f32 %v74, %v177
    %v179 = vpop.f32.mrb[0].mxu0
    %v180 = vadd.f32 %v78, %v179
    %181 = vmatprep.mubr.f32.mxu0 0.0
    %182 = vmatmul.mubr.f32.gmra.mrb[0].mxu0 %v91
    %v183 = vpop.f32.mrb[0].mxu0
    %v184 = vadd.f32 %v74, %v183
    %v185 = vpop.f32.mrb[0].mxu0
    %v186 = vadd.f32 %v78, %v185
    %187 = vmatprep.mubr.f32.mxu0 0.0
    %188 = vmatmul.mubr.f32.gmra.mrb[0].mxu0 %v94
    %v189 = vpop.f32.mrb[0].mxu0
    %v190 = vadd.f32 %v74, %v189
    %v191 = vpop.f32.mrb[0].mxu0
    %v192 = vadd.f32 %v78, %v191
    %193 = vmatprep.mubr.f32.mxu0 0.0
    %194 = vmatmul.mubr.f32.gmra.mrb[0].mxu0 %v97
    %v195 = vpop.f32.mrb[0].mxu0
    %v196 = vadd.f32 %v74, %v195
    %v197 = vpop.f32.mrb[0].mxu0
    %v198 = vadd.f32 %v78, %v197
    %199 = vmatprep.mubr.f32.mxu0 0.0
    %200 = vmatmul.mubr.f32.gmra.mrb[0].mxu0 %v100
    %v201 = vpop.f32.mrb[0].mxu0
    %v202 = vadd.f32 %v74, %v201
    %v203 = vpop.f32.mrb[0].mxu0
    %v204 = vadd.f32 %v78, %v203
    %205 = vmatprep.mubr.f32.mxu0 0.0
    %206 = vmatmul.mubr.f32.gmra.mrb[0].mxu0 %v103
    %v207 = vpop.f32.mrb[0].mxu0
    %v208 = vadd.f32 %v74, %v207
    %v209 = vpop.f32.mrb[0].mxu0
    %v210 = vadd.f32 %v78, %v209
    %211 = vmatprep.mubr.f32.mxu0 0.0
    %212 = vmatmul.mubr.f32.gmra.mrb[0].mxu0 %v106
    %v213 = vpop.f32.mrb[0].mxu0
    %v214 = vadd.f32 %v74, %v213
    %v215 = vpop.f32.mrb[0].mxu0
    %v216 = vadd.f32 %v78, %v215
    %217 = vmatprep.mubr.f32.mxu0 0.0
    %218 = vmatmul.mubr.f32.gmra.mrb[0].mxu0 %v109
    %v219 = vpop.f32.mrb[0].mxu0
    %v220 = vadd.f32 %v74, %v219
    %v221 = vpop.f32.mrb[0].mxu0
    %v222 = vadd.f32 %v78, %v221
    %223 = vdwg.mxu0
    %224 = vmatprep.subr.mxu0 0.0
    %225 = vmatpush1.msra.mxu0 %v65
    %226 = vmatprep.subr.mxu0 0.0
    %227 = vmatpush1.msra.mxu0 %v68
    %228 = vmatprep.subr.mxu0 0.0
    %229 = vmatpush1.msra.mxu0 0.0
    %230 = vmatprep.subr.mxu0 0.0
    %231 = vmatpush1.msra.mxu0 0.0
    %232 = vmatprep.subr.mxu0 0.0
    %233 = vmatpush1.msra.mxu0 0.0
    %234 = vmatprep.subr.mxu0 0.0
    %235 = vmatpush1.msra.mxu0 0.0
    %236 = vmatprep.subr.mxu0 0.0
    %237 = vmatpush1.msra.mxu0 0.0
    %238 = vmatprep.subr.mxu0 0.0
    %239 = vmatpush1.msra.mxu0 0.0
    %240 = vmatprep.subr.mxu0 0.0
    %241 = vmatpush1.msra.mxu0 0.0
    %242 = vmatprep.subr.mxu0 0.0
    %243 = vmatpush1.msra.mxu0 0.0
    %244 = vmatprep.subr.mxu0 0.0
    %245 = vmatpush1.msra.mxu0 0.0
    %246 = vmatprep.subr.mxu0 0.0
    %247 = vmatpush1.msra.mxu0 0.0
    %248 = vmatprep.subr.mxu0 0.0
    %249 = vmatpush1.msra.mxu0 0.0
    %250 = vmatprep.subr.mxu0 0.0
    %251 = vmatpush1.msra.mxu0 0.0
    %252 = vmatprep.subr.mxu0 0.0
    %253 = vmatpush1.msra.mxu0 0.0
    %254 = vmatprep.subr.mxu0 0.0
    %255 = vmatpush1.msra.mxu0 0.0
    %256 = vmatprep.subr.mxu0 0.0
    %257 = vmatpush1.msra.mxu0 0.0
    %258 = vmatprep.subr.mxu0 0.0
    %259 = vmatpush1.msra.mxu0 0.0
    %260 = vmatprep.subr.mxu0 0.0
    %261 = vmatpush1.msra.mxu0 0.0
    %262 = vmatprep.subr.mxu0 0.0
    %263 = vmatpush1.msra.mxu0 0.0
    %264 = vmatprep.subr.mxu0 0.0
    %265 = vmatpush1.msra.mxu0 0.0
    %266 = vmatprep.subr.mxu0 0.0
    %267 = vmatpush1.msra.mxu0 0.0
    %268 = vmatprep.subr.mxu0 0.0
    %269 = vmatpush1.msra.mxu0 0.0
    %270 = vmatprep.subr.mxu0 0.0
    %271 = vmatpush1.msra.mxu0 0.0
    %272 = vmatprep.subr.mxu0 0.0
    %273 = vmatpush1.msra.mxu0 0.0
    %274 = vmatprep.subr.mxu0 0.0
    %275 = vmatpush1.msra.mxu0 0.0
    %276 = vmatprep.subr.mxu0 0.0
    %277 = vmatpush1.msra.mxu0 0.0
    %278 = vmatprep.subr.mxu0 0.0
    %279 = vmatpush1.msra.mxu0 0.0
    %280 = vmatprep.subr.mxu0 0.0
    %281 = vmatpush1.msra.mxu0 0.0
    %282 = vmatprep.subr.mxu0 0.0
    %283 = vmatpush1.msra.mxu0 0.0
    %284 = vmatprep.subr.mxu0 0.0
    %285 = vmatpush1.msra.mxu0 0.0
    %286 = vmatprep.subr.mxu0 0.0
    %287 = vmatpush1.msra.mxu0 0.0
    %288 = vmatprep.mubr.f32.mxu0 0.0
    %289 = vmatmul.mubr.f32.gmra.mrb[0].mxu0 %v88
    %v290 = vpop.f32.mrb[0].mxu0
    %v291 = vadd.f32 %v82, %v290
    %v292 = vpop.f32.mrb[0].mxu0
    %293 = vmatprep.mubr.f32.mxu0 0.0
    %294 = vmatmul.mubr.f32.gmra.mrb[0].mxu0 %v91
    %v295 = vpop.f32.mrb[0].mxu0
    %v296 = vadd.f32 %v82, %v295
    %v297 = vpop.f32.mrb[0].mxu0
    %298 = vmatprep.mubr.f32.mxu0 0.0
    %299 = vmatmul.mubr.f32.gmra.mrb[0].mxu0 %v94
    %v300 = vpop.f32.mrb[0].mxu0
    %v301 = vadd.f32 %v82, %v300
    %v302 = vpop.f32.mrb[0].mxu0
    %303 = vmatprep.mubr.f32.mxu0 0.0
    %304 = vmatmul.mubr.f32.gmra.mrb[0].mxu0 %v97
    %v305 = vpop.f32.mrb[0].mxu0
    %v306 = vadd.f32 %v82, %v305
    %v307 = vpop.f32.mrb[0].mxu0
    %308 = vmatprep.mubr.f32.mxu0 0.0
    %309 = vmatmul.mubr.f32.gmra.mrb[0].mxu0 %v100
    %v310 = vpop.f32.mrb[0].mxu0
    %v311 = vadd.f32 %v82, %v310
    %v312 = vpop.f32.mrb[0].mxu0
    %313 = vmatprep.mubr.f32.mxu0 0.0
    %314 = vmatmul.mubr.f32.gmra.mrb[0].mxu0 %v103
    %v315 = vpop.f32.mrb[0].mxu0
    %v316 = vadd.f32 %v82, %v315
    %v317 = vpop.f32.mrb[0].mxu0
    %318 = vmatprep.mubr.f32.mxu0 0.0
    %319 = vmatmul.mubr.f32.gmra.mrb[0].mxu0 %v106
    %v320 = vpop.f32.mrb[0].mxu0
    %v321 = vadd.f32 %v82, %v320
    %v322 = vpop.f32.mrb[0].mxu0
    %323 = vmatprep.mubr.f32.mxu0 0.0
    %324 = vmatmul.mubr.f32.gmra.mrb[0].mxu0 %v109
    %v325 = vpop.f32.mrb[0].mxu0
    %v326 = vadd.f32 %v82, %v325
    %v327 = vpop.f32.mrb[0].mxu0
    %328 = vdwg.mxu0
    %v329 = vld [vmem:[#allocation2] sm:$0xff]
    %v330 = vld [vmem:[#allocation2 + $0x8] sm:$0xff]
    %v331 = vld [vmem:[#allocation2 + $0x10] sm:$0xff]
    %v332 = vld [vmem:[#allocation2 + $0x18] sm:$0xff]
    %v333 = vld [vmem:[#allocation2 + $0x20] sm:$0xff]
    %v334 = vld [vmem:[#allocation2 + $0x28] sm:$0xff]
    %v335 = vld [vmem:[#allocation2 + $0x30] sm:$0xff]
    %v336 = vld [vmem:[#allocation2 + $0x38] sm:$0xff]
    %v337 = vld [vmem:[#allocation2 + $0x40] sm:$0xff]
    %v338 = vld [vmem:[#allocation2 + $0x48] sm:$0xff]
    %v339 = vld [vmem:[#allocation2 + $0x50] sm:$0xff]
    %v340 = vld [vmem:[#allocation2 + $0x58] sm:$0xff]
    %v341 = vld [vmem:[#allocation2 + $0x60] sm:$0xff]
    %v342 = vld [vmem:[#allocation2 + $0x68] sm:$0xff]
    %v343 = vld [vmem:[#allocation2 + $0x70] sm:$0xff]
    %v344 = vld [vmem:[#allocation2 + $0x78] sm:$0xff]
    %v345 = vld [vmem:[#allocation2 + $0x80] sm:$0xff]
    %v346 = vld [vmem:[#allocation2 + $0x88] sm:$0xff]
    %v347 = vld [vmem:[#allocation2 + $0x90] sm:$0xff]
    %v348 = vld [vmem:[#allocation2 + $0x98] sm:$0xff]
    %v349 = vld [vmem:[#allocation2 + $0xa0] sm:$0xff]
    %v350 = vld [vmem:[#allocation2 + $0xa8] sm:$0xff]
    %v351 = vld [vmem:[#allocation2 + $0xb0] sm:$0xff]
    %v352 = vld [vmem:[#allocation2 + $0xb8] sm:$0xff]
    %v353 = vld [vmem:[#allocation2 + $0xc0] sm:$0xff]
    %v354 = vld [vmem:[#allocation2 + $0xc8] sm:$0xff]
    %v355 = vld [vmem:[#allocation2 + $0xd0] sm:$0xff]
    %v356 = vld [vmem:[#allocation2 + $0xd8] sm:$0xff]
    %v357 = vld [vmem:[#allocation2 + $0xe0] sm:$0xff]
    %v358 = vld [vmem:[#allocation2 + $0xe8] sm:$0xff]
    %v359 = vld [vmem:[#allocation2 + $0xf0] sm:$0xff]
    %v360 = vld [vmem:[#allocation2 + $0xf8] sm:$0xff]
    %v361 = vld [vmem:[#allocation2 + $0x100] sm:$0xff]
    %v362 = vld [vmem:[#allocation2 + $0x108] sm:$0xff]
    %v363 = vld [vmem:[#allocation2 + $0x110] sm:$0xff]
    %v364 = vld [vmem:[#allocation2 + $0x118] sm:$0xff]
    %v365 = vld [vmem:[#allocation2 + $0x120] sm:$0xff]
    %v366 = vld [vmem:[#allocation2 + $0x128] sm:$0xff]
    %v367 = vld [vmem:[#allocation2 + $0x130] sm:$0xff]
    %v368 = vld [vmem:[#allocation2 + $0x138] sm:$0xff]
    %v369 = vld [vmem:[#allocation2 + $0x140] sm:$0xff]
    %v370 = vld [vmem:[#allocation2 + $0x148] sm:$0xff]
    %v371 = vld [vmem:[#allocation2 + $0x150] sm:$0xff]
    %v372 = vld [vmem:[#allocation2 + $0x158] sm:$0xff]
    %v373 = vld [vmem:[#allocation2 + $0x160] sm:$0xff]
    %v374 = vld [vmem:[#allocation2 + $0x168] sm:$0xff]
    %v375 = vld [vmem:[#allocation2 + $0x170] sm:$0xff]
    %v376 = vld [vmem:[#allocation2 + $0x178] sm:$0xff]
    %v377 = vld [vmem:[%s4] sm:$0x1]
    %378 = vmatprep.subr.mxu0 %v330
    %379 = vmatpush1.msra.mxu0 %v329
    %380 = vmatprep.subr.mxu0 %v333
    %381 = vmatpush1.msra.mxu0 %v332
    %382 = vmatprep.subr.mxu0 %v336
    %383 = vmatpush1.msra.mxu0 %v335
    %384 = vmatprep.subr.mxu0 %v339
    %385 = vmatpush1.msra.mxu0 %v338
    %386 = vmatprep.subr.mxu0 %v342
    %387 = vmatpush1.msra.mxu0 %v341
    %388 = vmatprep.subr.mxu0 %v345
    %389 = vmatpush1.msra.mxu0 %v344
    %390 = vmatprep.subr.mxu0 %v348
    %391 = vmatpush1.msra.mxu0 %v347
    %392 = vmatprep.subr.mxu0 %v351
    %393 = vmatpush1.msra.mxu0 %v350
    %394 = vmatprep.subr.mxu0 %v354
    %395 = vmatpush1.msra.mxu0 %v353
    %396 = vmatprep.subr.mxu0 %v357
    %397 = vmatpush1.msra.mxu0 %v356
    %398 = vmatprep.subr.mxu0 %v360
    %399 = vmatpush1.msra.mxu0 %v359
    %400 = vmatprep.subr.mxu0 %v363
    %401 = vmatpush1.msra.mxu0 %v362
    %402 = vmatprep.subr.mxu0 %v366
    %403 = vmatpush1.msra.mxu0 %v365
    %404 = vmatprep.subr.mxu0 %v369
    %405 = vmatpush1.msra.mxu0 %v368
    %406 = vmatprep.subr.mxu0 %v372
    %407 = vmatpush1.msra.mxu0 %v371
    %408 = vmatprep.subr.mxu0 %v375
    %409 = vmatpush1.msra.mxu0 %v374
    %410 = vmatprep.subr.mxu0 0.0
    %411 = vmatpush1.msra.mxu0 0.0
    %412 = vmatprep.subr.mxu0 0.0
    %413 = vmatpush1.msra.mxu0 0.0
    %414 = vmatprep.subr.mxu0 0.0
    %415 = vmatpush1.msra.mxu0 0.0
    %416 = vmatprep.subr.mxu0 0.0
    %417 = vmatpush1.msra.mxu0 0.0
    %418 = vmatprep.subr.mxu0 0.0
    %419 = vmatpush1.msra.mxu0 0.0
    %420 = vmatprep.subr.mxu0 0.0
    %421 = vmatpush1.msra.mxu0 0.0
    %422 = vmatprep.subr.mxu0 0.0
    %423 = vmatpush1.msra.mxu0 0.0
    %424 = vmatprep.subr.mxu0 0.0
    %425 = vmatpush1.msra.mxu0 0.0
    %426 = vmatprep.subr.mxu0 0.0
    %427 = vmatpush1.msra.mxu0 0.0
    %428 = vmatprep.subr.mxu0 0.0
    %429 = vmatpush1.msra.mxu0 0.0
    %430 = vmatprep.subr.mxu0 0.0
    %431 = vmatpush1.msra.mxu0 0.0
    %432 = vmatprep.subr.mxu0 0.0
    %433 = vmatpush1.msra.mxu0 0.0
    %434 = vmatprep.subr.mxu0 0.0
    %435 = vmatpush1.msra.mxu0 0.0
    %436 = vmatprep.subr.mxu0 0.0
    %437 = vmatpush1.msra.mxu0 0.0
    %438 = vmatprep.subr.mxu0 0.0
    %439 = vmatpush1.msra.mxu0 0.0
    %440 = vmatprep.subr.mxu0 0.0
    %441 = vmatpush1.msra.mxu0 0.0
    %442 = vmatprep.mubr.f32.mxu0 0.0
    %443 = vmatmul.mubr.f32.gmra.mrb[0].mxu0 0.0
    %v444 = vpop.f32.mrb[0].mxu0
    %v445 = vadd.f32 0.0, %v444
    %v446 = vpop.f32.mrb[0].mxu0
    %v447 = vadd.f32 0.0, %v446
    %448 = vdwg.mxu0
    %449 = vmatprep.subr.mxu0 0.0
    %450 = vmatpush1.msra.mxu0 %v331
    %451 = vmatprep.subr.mxu0 0.0
    %452 = vmatpush1.msra.mxu0 %v334
    %453 = vmatprep.subr.mxu0 0.0
    %454 = vmatpush1.msra.mxu0 %v337
    %455 = vmatprep.subr.mxu0 0.0
    %456 = vmatpush1.msra.mxu0 %v340
    %457 = vmatprep.subr.mxu0 0.0
    %458 = vmatpush1.msra.mxu0 %v343
    %459 = vmatprep.subr.mxu0 0.0
    %460 = vmatpush1.msra.mxu0 %v346
    %461 = vmatprep.subr.mxu0 0.0
    %462 = vmatpush1.msra.mxu0 %v349
    %463 = vmatprep.subr.mxu0 0.0
    %464 = vmatpush1.msra.mxu0 %v352
    %465 = vmatprep.subr.mxu0 0.0
    %466 = vmatpush1.msra.mxu0 %v355
    %467 = vmatprep.subr.mxu0 0.0
    %468 = vmatpush1.msra.mxu0 %v358
    %469 = vmatprep.subr.mxu0 0.0
    %470 = vmatpush1.msra.mxu0 %v361
    %471 = vmatprep.subr.mxu0 0.0
    %472 = vmatpush1.msra.mxu0 %v364
    %473 = vmatprep.subr.mxu0 0.0
    %474 = vmatpush1.msra.mxu0 %v367
    %475 = vmatprep.subr.mxu0 0.0
    %476 = vmatpush1.msra.mxu0 %v370
    %477 = vmatprep.subr.mxu0 0.0
    %478 = vmatpush1.msra.mxu0 %v373
    %479 = vmatprep.subr.mxu0 0.0
    %480 = vmatpush1.msra.mxu0 %v376
    %481 = vmatprep.subr.mxu0 0.0
    %482 = vmatpush1.msra.mxu0 0.0
    %483 = vmatprep.subr.mxu0 0.0
    %484 = vmatpush1.msra.mxu0 0.0
    %485 = vmatprep.subr.mxu0 0.0
    %486 = vmatpush1.msra.mxu0 0.0
    %487 = vmatprep.subr.mxu0 0.0
    %488 = vmatpush1.msra.mxu0 0.0
    %489 = vmatprep.subr.mxu0 0.0
    %490 = vmatpush1.msra.mxu0 0.0
    %491 = vmatprep.subr.mxu0 0.0
    %492 = vmatpush1.msra.mxu0 0.0
    %493 = vmatprep.subr.mxu0 0.0
    %494 = vmatpush1.msra.mxu0 0.0
    %495 = vmatprep.subr.mxu0 0.0
    %496 = vmatpush1.msra.mxu0 0.0
    %497 = vmatprep.subr.mxu0 0.0
    %498 = vmatpush1.msra.mxu0 0.0
    %499 = vmatprep.subr.mxu0 0.0
    %500 = vmatpush1.msra.mxu0 0.0
    %501 = vmatprep.subr.mxu0 0.0
    %502 = vmatpush1.msra.mxu0 0.0
    %503 = vmatprep.subr.mxu0 0.0
    %504 = vmatpush1.msra.mxu0 0.0
    %505 = vmatprep.subr.mxu0 0.0
    %506 = vmatpush1.msra.mxu0 0.0
    %507 = vmatprep.subr.mxu0 0.0
    %508 = vmatpush1.msra.mxu0 0.0
    %509 = vmatprep.subr.mxu0 0.0
    %510 = vmatpush1.msra.mxu0 0.0
    %511 = vmatprep.subr.mxu0 0.0
    %512 = vmatpush1.msra.mxu0 0.0
    %513 = vmatprep.mubr.f32.mxu0 0.0
    %514 = vmatmul.mubr.f32.gmra.mrb[0].mxu0 0.0
    %v515 = vpop.f32.mrb[0].mxu0
    %v516 = vadd.f32 0.0, %v515
    %v517 = vpop.f32.mrb[0].mxu0
    %518 = vdwg.mxu0
    %v519 = vadd.f32 %v178, %v445
    %v520 = vxor.u32 %v519, 2147483648
    %v521 = vmul.f32 %v520, 1.442695
    %v522 = vpow.pop %v521
    %v523 = vadd.f32 %v522, 1.0
    %v524 = vrcp.pop %v523
    %v525 = vmul.f32 1.0, %v524
    %v526 = vadd.f32 %v180, %v447
    %v527 = vxor.u32 %v526, 2147483648
    %v528 = vmul.f32 %v527, 1.442695
    %v529 = vpow.pop %v528
    %v530 = vadd.f32 %v529, 1.0
    %v531 = vrcp.pop %v530
    %v532 = vmul.f32 1.0, %v531
    %v534 = vlaneseq
    %v535 = vshrl.u32 %v534, 7
    %v536 = vsub.s32 0, %v535
    %v537 = vrot.slane %v377, %v536
    %v539 = vadd.f32 %v516, %v537
    %v540 = vmul.f32 %v525, %v539
    %v541 = vadd.f32 %v291, %v540
    %v542 = vtanh.pop %v541
    %v543 = vsub.f32 1.0, %v532
    %v544 = vmul.f32 %v543, %v542
    %v545 = vmul.f32 %v532, 0.0
    %v546 = vadd.f32 %v544, %v545
    %547 = vmatprep.subr.mxu0 %v330
    %548 = vmatpush1.msra.mxu0 %v329
    %549 = vmatprep.subr.mxu0 %v333
    %550 = vmatpush1.msra.mxu0 %v332
    %551 = vmatprep.subr.mxu0 %v336
    %552 = vmatpush1.msra.mxu0 %v335
    %553 = vmatprep.subr.mxu0 %v339
    %554 = vmatpush1.msra.mxu0 %v338
    %555 = vmatprep.subr.mxu0 %v342
    %556 = vmatpush1.msra.mxu0 %v341
    %557 = vmatprep.subr.mxu0 %v345
    %558 = vmatpush1.msra.mxu0 %v344
    %559 = vmatprep.subr.mxu0 %v348
    %560 = vmatpush1.msra.mxu0 %v347
    %561 = vmatprep.subr.mxu0 %v351
    %562 = vmatpush1.msra.mxu0 %v350
    %563 = vmatprep.subr.mxu0 %v354
    %564 = vmatpush1.msra.mxu0 %v353
    %565 = vmatprep.subr.mxu0 %v357
    %566 = vmatpush1.msra.mxu0 %v356
    %567 = vmatprep.subr.mxu0 %v360
    %568 = vmatpush1.msra.mxu0 %v359
    %569 = vmatprep.subr.mxu0 %v363
    %570 = vmatpush1.msra.mxu0 %v362
    %571 = vmatprep.subr.mxu0 %v366
    %572 = vmatpush1.msra.mxu0 %v365
    %573 = vmatprep.subr.mxu0 %v369
    %574 = vmatpush1.msra.mxu0 %v368
    %575 = vmatprep.subr.mxu0 %v372
    %576 = vmatpush1.msra.mxu0 %v371
    %577 = vmatprep.subr.mxu0 %v375
    %578 = vmatpush1.msra.mxu0 %v374
    %579 = vmatprep.subr.mxu0 0.0
    %580 = vmatpush1.msra.mxu0 0.0
    %581 = vmatprep.subr.mxu0 0.0
    %582 = vmatpush1.msra.mxu0 0.0
    %583 = vmatprep.subr.mxu0 0.0
    %584 = vmatpush1.msra.mxu0 0.0
    %585 = vmatprep.subr.mxu0 0.0
    %586 = vmatpush1.msra.mxu0 0.0
    %587 = vmatprep.subr.mxu0 0.0
    %588 = vmatpush1.msra.mxu0 0.0
    %589 = vmatprep.subr.mxu0 0.0
    %590 = vmatpush1.msra.mxu0 0.0
    %591 = vmatprep.subr.mxu0 0.0
    %592 = vmatpush1.msra.mxu0 0.0
    %593 = vmatprep.subr.mxu0 0.0
    %594 = vmatpush1.msra.mxu0 0.0
    %595 = vmatprep.subr.mxu0 0.0
    %596 = vmatpush1.msra.mxu0 0.0
    %597 = vmatprep.subr.mxu0 0.0
    %598 = vmatpush1.msra.mxu0 0.0
    %599 = vmatprep.subr.mxu0 0.0
    %600 = vmatpush1.msra.mxu0 0.0
    %601 = vmatprep.subr.mxu0 0.0
    %602 = vmatpush1.msra.mxu0 0.0
    %603 = vmatprep.subr.mxu0 0.0
    %604 = vmatpush1.msra.mxu0 0.0
    %605 = vmatprep.subr.mxu0 0.0
    %606 = vmatpush1.msra.mxu0 0.0
    %607 = vmatprep.subr.mxu0 0.0
    %608 = vmatpush1.msra.mxu0 0.0
    %609 = vmatprep.subr.mxu0 0.0
    %610 = vmatpush1.msra.mxu0 0.0
    %611 = vmatprep.mubr.f32.mxu0 0.0
    %612 = vmatmul.mubr.f32.gmra.mrb[0].mxu0 %v546
    %v613 = vpop.f32.mrb[0].mxu0
    %v614 = vadd.f32 0.0, %v613
    %v615 = vpop.f32.mrb[0].mxu0
    %v616 = vadd.f32 0.0, %v615
    %617 = vdwg.mxu0
    %618 = vmatprep.subr.mxu0 0.0
    %619 = vmatpush1.msra.mxu0 %v331
    %620 = vmatprep.subr.mxu0 0.0
    %621 = vmatpush1.msra.mxu0 %v334
    %622 = vmatprep.subr.mxu0 0.0
    %623 = vmatpush1.msra.mxu0 %v337
    %624 = vmatprep.subr.mxu0 0.0
    %625 = vmatpush1.msra.mxu0 %v340
    %626 = vmatprep.subr.mxu0 0.0
    %627 = vmatpush1.msra.mxu0 %v343
    %628 = vmatprep.subr.mxu0 0.0
    %629 = vmatpush1.msra.mxu0 %v346
    %630 = vmatprep.subr.mxu0 0.0
    %631 = vmatpush1.msra.mxu0 %v349
    %632 = vmatprep.subr.mxu0 0.0
    %633 = vmatpush1.msra.mxu0 %v352
    %634 = vmatprep.subr.mxu0 0.0
    %635 = vmatpush1.msra.mxu0 %v355
    %636 = vmatprep.subr.mxu0 0.0
    %637 = vmatpush1.msra.mxu0 %v358
    %638 = vmatprep.subr.mxu0 0.0
    %639 = vmatpush1.msra.mxu0 %v361
    %640 = vmatprep.subr.mxu0 0.0
    %641 = vmatpush1.msra.mxu0 %v364
    %642 = vmatprep.subr.mxu0 0.0
    %643 = vmatpush1.msra.mxu0 %v367
    %644 = vmatprep.subr.mxu0 0.0
    %645 = vmatpush1.msra.mxu0 %v370
    %646 = vmatprep.subr.mxu0 0.0
    %647 = vmatpush1.msra.mxu0 %v373
    %648 = vmatprep.subr.mxu0 0.0
    %649 = vmatpush1.msra.mxu0 %v376
    %650 = vmatprep.subr.mxu0 0.0
    %651 = vmatpush1.msra.mxu0 0.0
    %652 = vmatprep.subr.mxu0 0.0
    %653 = vmatpush1.msra.mxu0 0.0
    %654 = vmatprep.subr.mxu0 0.0
    %655 = vmatpush1.msra.mxu0 0.0
    %656 = vmatprep.subr.mxu0 0.0
    %657 = vmatpush1.msra.mxu0 0.0
    %658 = vmatprep.subr.mxu0 0.0
    %659 = vmatpush1.msra.mxu0 0.0
    %660 = vmatprep.subr.mxu0 0.0
    %661 = vmatpush1.msra.mxu0 0.0
    %662 = vmatprep.subr.mxu0 0.0
    %663 = vmatpush1.msra.mxu0 0.0
    %664 = vmatprep.subr.mxu0 0.0
    %665 = vmatpush1.msra.mxu0 0.0
    %666 = vmatprep.subr.mxu0 0.0
    %667 = vmatpush1.msra.mxu0 0.0
    %668 = vmatprep.subr.mxu0 0.0
    %669 = vmatpush1.msra.mxu0 0.0
    %670 = vmatprep.subr.mxu0 0.0
    %671 = vmatpush1.msra.mxu0 0.0
    %672 = vmatprep.subr.mxu0 0.0
    %673 = vmatpush1.msra.mxu0 0.0
    %674 = vmatprep.subr.mxu0 0.0
    %675 = vmatpush1.msra.mxu0 0.0
    %676 = vmatprep.subr.mxu0 0.0
    %677 = vmatpush1.msra.mxu0 0.0
    %678 = vmatprep.subr.mxu0 0.0
    %679 = vmatpush1.msra.mxu0 0.0
    %680 = vmatprep.subr.mxu0 0.0
    %681 = vmatpush1.msra.mxu0 0.0
    %682 = vmatprep.mubr.f32.mxu0 0.0
    %683 = vmatmul.mubr.f32.gmra.mrb[0].mxu0 %v546
    %v684 = vpop.f32.mrb[0].mxu0
    %v685 = vadd.f32 0.0, %v684
    %v686 = vpop.f32.mrb[0].mxu0
    %687 = vdwg.mxu0
    %v688 = vadd.f32 %v184, %v614
    %v689 = vxor.u32 %v688, 2147483648
    %v690 = vmul.f32 %v689, 1.442695
    %v691 = vpow.pop %v690
    %v692 = vadd.f32 %v691, 1.0
    %v693 = vrcp.pop %v692
    %v694 = vmul.f32 1.0, %v693
    %v695 = vadd.f32 %v186, %v616
    %v696 = vxor.u32 %v695, 2147483648
    %v697 = vmul.f32 %v696, 1.442695
    %v698 = vpow.pop %v697
    %v699 = vadd.f32 %v698, 1.0
    %v700 = vrcp.pop %v699
    %v701 = vmul.f32 1.0, %v700
    %v702 = vadd.f32 %v685, %v537
    %v703 = vmul.f32 %v694, %v702
    %v704 = vadd.f32 %v296, %v703
    %v705 = vtanh.pop %v704
    %v706 = vsub.f32 1.0, %v701
    %v707 = vmul.f32 %v706, %v705
    %v708 = vmul.f32 %v701, %v546
    %v709 = vadd.f32 %v707, %v708
    %710 = vmatprep.subr.mxu0 %v330
    %711 = vmatpush1.msra.mxu0 %v329
    %712 = vmatprep.subr.mxu0 %v333
    %713 = vmatpush1.msra.mxu0 %v332
    %714 = vmatprep.subr.mxu0 %v336
    %715 = vmatpush1.msra.mxu0 %v335
    %716 = vmatprep.subr.mxu0 %v339
    %717 = vmatpush1.msra.mxu0 %v338
    %718 = vmatprep.subr.mxu0 %v342
    %719 = vmatpush1.msra.mxu0 %v341
    %720 = vmatprep.subr.mxu0 %v345
    %721 = vmatpush1.msra.mxu0 %v344
    %722 = vmatprep.subr.mxu0 %v348
    %723 = vmatpush1.msra.mxu0 %v347
    %724 = vmatprep.subr.mxu0 %v351
    %725 = vmatpush1.msra.mxu0 %v350
    %726 = vmatprep.subr.mxu0 %v354
    %727 = vmatpush1.msra.mxu0 %v353
    %728 = vmatprep.subr.mxu0 %v357
    %729 = vmatpush1.msra.mxu0 %v356
    %730 = vmatprep.subr.mxu0 %v360
    %731 = vmatpush1.msra.mxu0 %v359
    %732 = vmatprep.subr.mxu0 %v363
    %733 = vmatpush1.msra.mxu0 %v362
    %734 = vmatprep.subr.mxu0 %v366
    %735 = vmatpush1.msra.mxu0 %v365
    %736 = vmatprep.subr.mxu0 %v369
    %737 = vmatpush1.msra.mxu0 %v368
    %738 = vmatprep.subr.mxu0 %v372
    %739 = vmatpush1.msra.mxu0 %v371
    %740 = vmatprep.subr.mxu0 %v375
    %741 = vmatpush1.msra.mxu0 %v374
    %742 = vmatprep.subr.mxu0 0.0
    %743 = vmatpush1.msra.mxu0 0.0
    %744 = vmatprep.subr.mxu0 0.0
    %745 = vmatpush1.msra.mxu0 0.0
    %746 = vmatprep.subr.mxu0 0.0
    %747 = vmatpush1.msra.mxu0 0.0
    %748 = vmatprep.subr.mxu0 0.0
    %749 = vmatpush1.msra.mxu0 0.0
    %750 = vmatprep.subr.mxu0 0.0
    %751 = vmatpush1.msra.mxu0 0.0
    %752 = vmatprep.subr.mxu0 0.0
    %753 = vmatpush1.msra.mxu0 0.0
    %754 = vmatprep.subr.mxu0 0.0
    %755 = vmatpush1.msra.mxu0 0.0
    %756 = vmatprep.subr.mxu0 0.0
    %757 = vmatpush1.msra.mxu0 0.0
    %758 = vmatprep.subr.mxu0 0.0
    %759 = vmatpush1.msra.mxu0 0.0
    %760 = vmatprep.subr.mxu0 0.0
    %761 = vmatpush1.msra.mxu0 0.0
    %762 = vmatprep.subr.mxu0 0.0
    %763 = vmatpush1.msra.mxu0 0.0
    %764 = vmatprep.subr.mxu0 0.0
    %765 = vmatpush1.msra.mxu0 0.0
    %766 = vmatprep.subr.mxu0 0.0
    %767 = vmatpush1.msra.mxu0 0.0
    %768 = vmatprep.subr.mxu0 0.0
    %769 = vmatpush1.msra.mxu0 0.0
    %770 = vmatprep.subr.mxu0 0.0
    %771 = vmatpush1.msra.mxu0 0.0
    %772 = vmatprep.subr.mxu0 0.0
    %773 = vmatpush1.msra.mxu0 0.0
    %774 = vmatprep.mubr.f32.mxu0 0.0
    %775 = vmatmul.mubr.f32.gmra.mrb[0].mxu0 %v709
    %v776 = vpop.f32.mrb[0].mxu0
    %v777 = vadd.f32 0.0, %v776
    %v778 = vpop.f32.mrb[0].mxu0
    %v779 = vadd.f32 0.0, %v778
    %780 = vdwg.mxu0
    %781 = vmatprep.subr.mxu0 0.0
    %782 = vmatpush1.msra.mxu0 %v331
    %783 = vmatprep.subr.mxu0 0.0
    %784 = vmatpush1.msra.mxu0 %v334
    %785 = vmatprep.subr.mxu0 0.0
    %786 = vmatpush1.msra.mxu0 %v337
    %787 = vmatprep.subr.mxu0 0.0
    %788 = vmatpush1.msra.mxu0 %v340
    %789 = vmatprep.subr.mxu0 0.0
    %790 = vmatpush1.msra.mxu0 %v343
    %791 = vmatprep.subr.mxu0 0.0
    %792 = vmatpush1.msra.mxu0 %v346
    %793 = vmatprep.subr.mxu0 0.0
    %794 = vmatpush1.msra.mxu0 %v349
    %795 = vmatprep.subr.mxu0 0.0
    %796 = vmatpush1.msra.mxu0 %v352
    %797 = vmatprep.subr.mxu0 0.0
    %798 = vmatpush1.msra.mxu0 %v355
    %799 = vmatprep.subr.mxu0 0.0
    %800 = vmatpush1.msra.mxu0 %v358
    %801 = vmatprep.subr.mxu0 0.0
    %802 = vmatpush1.msra.mxu0 %v361
    %803 = vmatprep.subr.mxu0 0.0
    %804 = vmatpush1.msra.mxu0 %v364
    %805 = vmatprep.subr.mxu0 0.0
    %806 = vmatpush1.msra.mxu0 %v367
    %807 = vmatprep.subr.mxu0 0.0
    %808 = vmatpush1.msra.mxu0 %v370
    %809 = vmatprep.subr.mxu0 0.0
    %810 = vmatpush1.msra.mxu0 %v373
    %811 = vmatprep.subr.mxu0 0.0
    %812 = vmatpush1.msra.mxu0 %v376
    %813 = vmatprep.subr.mxu0 0.0
    %814 = vmatpush1.msra.mxu0 0.0
    %815 = vmatprep.subr.mxu0 0.0
    %816 = vmatpush1.msra.mxu0 0.0
    %817 = vmatprep.subr.mxu0 0.0
    %818 = vmatpush1.msra.mxu0 0.0
    %819 = vmatprep.subr.mxu0 0.0
    %820 = vmatpush1.msra.mxu0 0.0
    %821 = vmatprep.subr.mxu0 0.0
    %822 = vmatpush1.msra.mxu0 0.0
    %823 = vmatprep.subr.mxu0 0.0
    %824 = vmatpush1.msra.mxu0 0.0
    %825 = vmatprep.subr.mxu0 0.0
    %826 = vmatpush1.msra.mxu0 0.0
    %827 = vmatprep.subr.mxu0 0.0
    %828 = vmatpush1.msra.mxu0 0.0
    %829 = vmatprep.subr.mxu0 0.0
    %830 = vmatpush1.msra.mxu0 0.0
    %831 = vmatprep.subr.mxu0 0.0
    %832 = vmatpush1.msra.mxu0 0.0
    %833 = vmatprep.subr.mxu0 0.0
    %834 = vmatpush1.msra.mxu0 0.0
    %835 = vmatprep.subr.mxu0 0.0
    %836 = vmatpush1.msra.mxu0 0.0
    %837 = vmatprep.subr.mxu0 0.0
    %838 = vmatpush1.msra.mxu0 0.0
    %839 = vmatprep.subr.mxu0 0.0
    %840 = vmatpush1.msra.mxu0 0.0
    %841 = vmatprep.subr.mxu0 0.0
    %842 = vmatpush1.msra.mxu0 0.0
    %843 = vmatprep.subr.mxu0 0.0
    %844 = vmatpush1.msra.mxu0 0.0
    %845 = vmatprep.mubr.f32.mxu0 0.0
    %846 = vmatmul.mubr.f32.gmra.mrb[0].mxu0 %v709
    %v847 = vpop.f32.mrb[0].mxu0
    %v848 = vadd.f32 0.0, %v847
    %v849 = vpop.f32.mrb[0].mxu0
    %850 = vdwg.mxu0
    %v851 = vadd.f32 %v190, %v777
    %v852 = vxor.u32 %v851, 2147483648
    %v853 = vmul.f32 %v852, 1.442695
    %v854 = vpow.pop %v853
    %v855 = vadd.f32 %v854, 1.0
    %v856 = vrcp.pop %v855
    %v857 = vmul.f32 1.0, %v856
    %v858 = vadd.f32 %v192, %v779
    %v859 = vxor.u32 %v858, 2147483648
    %v860 = vmul.f32 %v859, 1.442695
    %v861 = vpow.pop %v860
    %v862 = vadd.f32 %v861, 1.0
    %v863 = vrcp.pop %v862
    %v864 = vmul.f32 1.0, %v863
    %v865 = vadd.f32 %v848, %v537
    %v866 = vmul.f32 %v857, %v865
    %v867 = vadd.f32 %v301, %v866
    %v868 = vtanh.pop %v867
    %v869 = vsub.f32 1.0, %v864
    %v870 = vmul.f32 %v869, %v868
    %v871 = vmul.f32 %v864, %v709
    %v872 = vadd.f32 %v870, %v871
    %873 = vmatprep.subr.mxu0 %v330
    %874 = vmatpush1.msra.mxu0 %v329
    %875 = vmatprep.subr.mxu0 %v333
    %876 = vmatpush1.msra.mxu0 %v332
    %877 = vmatprep.subr.mxu0 %v336
    %878 = vmatpush1.msra.mxu0 %v335
    %879 = vmatprep.subr.mxu0 %v339
    %880 = vmatpush1.msra.mxu0 %v338
    %881 = vmatprep.subr.mxu0 %v342
    %882 = vmatpush1.msra.mxu0 %v341
    %883 = vmatprep.subr.mxu0 %v345
    %884 = vmatpush1.msra.mxu0 %v344
    %885 = vmatprep.subr.mxu0 %v348
    %886 = vmatpush1.msra.mxu0 %v347
    %887 = vmatprep.subr.mxu0 %v351
    %888 = vmatpush1.msra.mxu0 %v350
    %889 = vmatprep.subr.mxu0 %v354
    %890 = vmatpush1.msra.mxu0 %v353
    %891 = vmatprep.subr.mxu0 %v357
    %892 = vmatpush1.msra.mxu0 %v356
    %893 = vmatprep.subr.mxu0 %v360
    %894 = vmatpush1.msra.mxu0 %v359
    %895 = vmatprep.subr.mxu0 %v363
    %896 = vmatpush1.msra.mxu0 %v362
    %897 = vmatprep.subr.mxu0 %v366
    %898 = vmatpush1.msra.mxu0 %v365
    %899 = vmatprep.subr.mxu0 %v369
    %900 = vmatpush1.msra.mxu0 %v368
    %901 = vmatprep.subr.mxu0 %v372
    %902 = vmatpush1.msra.mxu0 %v371
    %903 = vmatprep.subr.mxu0 %v375
    %904 = vmatpush1.msra.mxu0 %v374
    %905 = vmatprep.subr.mxu0 0.0
    %906 = vmatpush1.msra.mxu0 0.0
    %907 = vmatprep.subr.mxu0 0.0
    %908 = vmatpush1.msra.mxu0 0.0
    %909 = vmatprep.subr.mxu0 0.0
    %910 = vmatpush1.msra.mxu0 0.0
    %911 = vmatprep.subr.mxu0 0.0
    %912 = vmatpush1.msra.mxu0 0.0
    %913 = vmatprep.subr.mxu0 0.0
    %914 = vmatpush1.msra.mxu0 0.0
    %915 = vmatprep.subr.mxu0 0.0
    %916 = vmatpush1.msra.mxu0 0.0
    %917 = vmatprep.subr.mxu0 0.0
    %918 = vmatpush1.msra.mxu0 0.0
    %919 = vmatprep.subr.mxu0 0.0
    %920 = vmatpush1.msra.mxu0 0.0
    %921 = vmatprep.subr.mxu0 0.0
    %922 = vmatpush1.msra.mxu0 0.0
    %923 = vmatprep.subr.mxu0 0.0
    %924 = vmatpush1.msra.mxu0 0.0
    %925 = vmatprep.subr.mxu0 0.0
    %926 = vmatpush1.msra.mxu0 0.0
    %927 = vmatprep.subr.mxu0 0.0
    %928 = vmatpush1.msra.mxu0 0.0
    %929 = vmatprep.subr.mxu0 0.0
    %930 = vmatpush1.msra.mxu0 0.0
    %931 = vmatprep.subr.mxu0 0.0
    %932 = vmatpush1.msra.mxu0 0.0
    %933 = vmatprep.subr.mxu0 0.0
    %934 = vmatpush1.msra.mxu0 0.0
    %935 = vmatprep.subr.mxu0 0.0
    %936 = vmatpush1.msra.mxu0 0.0
    %937 = vmatprep.mubr.f32.mxu0 0.0
    %938 = vmatmul.mubr.f32.gmra.mrb[0].mxu0 %v872
    %v939 = vpop.f32.mrb[0].mxu0
    %v940 = vadd.f32 0.0, %v939
    %v941 = vpop.f32.mrb[0].mxu0
    %v942 = vadd.f32 0.0, %v941
    %943 = vdwg.mxu0
    %944 = vmatprep.subr.mxu0 0.0
    %945 = vmatpush1.msra.mxu0 %v331
    %946 = vmatprep.subr.mxu0 0.0
    %947 = vmatpush1.msra.mxu0 %v334
    %948 = vmatprep.subr.mxu0 0.0
    %949 = vmatpush1.msra.mxu0 %v337
    %950 = vmatprep.subr.mxu0 0.0
    %951 = vmatpush1.msra.mxu0 %v340
    %952 = vmatprep.subr.mxu0 0.0
    %953 = vmatpush1.msra.mxu0 %v343
    %954 = vmatprep.subr.mxu0 0.0
    %955 = vmatpush1.msra.mxu0 %v346
    %956 = vmatprep.subr.mxu0 0.0
    %957 = vmatpush1.msra.mxu0 %v349
    %958 = vmatprep.subr.mxu0 0.0
    %959 = vmatpush1.msra.mxu0 %v352
    %960 = vmatprep.subr.mxu0 0.0
    %961 = vmatpush1.msra.mxu0 %v355
    %962 = vmatprep.subr.mxu0 0.0
    %963 = vmatpush1.msra.mxu0 %v358
    %964 = vmatprep.subr.mxu0 0.0
    %965 = vmatpush1.msra.mxu0 %v361
    %966 = vmatprep.subr.mxu0 0.0
    %967 = vmatpush1.msra.mxu0 %v364
    %968 = vmatprep.subr.mxu0 0.0
    %969 = vmatpush1.msra.mxu0 %v367
    %970 = vmatprep.subr.mxu0 0.0
    %971 = vmatpush1.msra.mxu0 %v370
    %972 = vmatprep.subr.mxu0 0.0
    %973 = vmatpush1.msra.mxu0 %v373
    %974 = vmatprep.subr.mxu0 0.0
    %975 = vmatpush1.msra.mxu0 %v376
    %976 = vmatprep.subr.mxu0 0.0
    %977 = vmatpush1.msra.mxu0 0.0
    %978 = vmatprep.subr.mxu0 0.0
    %979 = vmatpush1.msra.mxu0 0.0
    %980 = vmatprep.subr.mxu0 0.0
    %981 = vmatpush1.msra.mxu0 0.0
    %982 = vmatprep.subr.mxu0 0.0
    %983 = vmatpush1.msra.mxu0 0.0
    %984 = vmatprep.subr.mxu0 0.0
    %985 = vmatpush1.msra.mxu0 0.0
    %986 = vmatprep.subr.mxu0 0.0
    %987 = vmatpush1.msra.mxu0 0.0
    %988 = vmatprep.subr.mxu0 0.0
    %989 = vmatpush1.msra.mxu0 0.0
    %990 = vmatprep.subr.mxu0 0.0
    %991 = vmatpush1.msra.mxu0 0.0
    %992 = vmatprep.subr.mxu0 0.0
    %993 = vmatpush1.msra.mxu0 0.0
    %994 = vmatprep.subr.mxu0 0.0
    %995 = vmatpush1.msra.mxu0 0.0
    %996 = vmatprep.subr.mxu0 0.0
    %997 = vmatpush1.msra.mxu0 0.0
    %998 = vmatprep.subr.mxu0 0.0
    %999 = vmatpush1.msra.mxu0 0.0
    %1000 = vmatprep.subr.mxu0 0.0
    %1001 = vmatpush1.msra.mxu0 0.0
    %1002 = vmatprep.subr.mxu0 0.0
    %1003 = vmatpush1.msra.mxu0 0.0
    %1004 = vmatprep.subr.mxu0 0.0
    %1005 = vmatpush1.msra.mxu0 0.0
    %1006 = vmatprep.subr.mxu0 0.0
    %1007 = vmatpush1.msra.mxu0 0.0
    %1008 = vmatprep.mubr.f32.mxu0 0.0
    %1009 = vmatmul.mubr.f32.gmra.mrb[0].mxu0 %v872
    %v1010 = vpop.f32.mrb[0].mxu0
    %v1011 = vadd.f32 0.0, %v1010
    %v1012 = vpop.f32.mrb[0].mxu0
    %1013 = vdwg.mxu0
    %v1014 = vadd.f32 %v196, %v940
    %v1015 = vxor.u32 %v1014, 2147483648
    %v1016 = vmul.f32 %v1015, 1.442695
    %v1017 = vpow.pop %v1016
    %v1018 = vadd.f32 %v1017, 1.0
    %v1019 = vrcp.pop %v1018
    %v1020 = vmul.f32 1.0, %v1019
    %v1021 = vadd.f32 %v198, %v942
    %v1022 = vxor.u32 %v1021, 2147483648
    %v1023 = vmul.f32 %v1022, 1.442695
    %v1024 = vpow.pop %v1023
    %v1025 = vadd.f32 %v1024, 1.0
    %v1026 = vrcp.pop %v1025
    %v1027 = vmul.f32 1.0, %v1026
    %v1028 = vadd.f32 %v1011, %v537
    %v1029 = vmul.f32 %v1020, %v1028
    %v1030 = vadd.f32 %v306, %v1029
    %v1031 = vtanh.pop %v1030
    %v1032 = vsub.f32 1.0, %v1027
    %v1033 = vmul.f32 %v1032, %v1031
    %v1034 = vmul.f32 %v1027, %v872
    %v1035 = vadd.f32 %v1033, %v1034
    %1036 = vmatprep.subr.mxu0 %v330
    %1037 = vmatpush1.msra.mxu0 %v329
    %1038 = vmatprep.subr.mxu0 %v333
    %1039 = vmatpush1.msra.mxu0 %v332
    %1040 = vmatprep.subr.mxu0 %v336
    %1041 = vmatpush1.msra.mxu0 %v335
    %1042 = vmatprep.subr.mxu0 %v339
    %1043 = vmatpush1.msra.mxu0 %v338
    %1044 = vmatprep.subr.mxu0 %v342
    %1045 = vmatpush1.msra.mxu0 %v341
    %1046 = vmatprep.subr.mxu0 %v345
    %1047 = vmatpush1.msra.mxu0 %v344
    %1048 = vmatprep.subr.mxu0 %v348
    %1049 = vmatpush1.msra.mxu0 %v347
    %1050 = vmatprep.subr.mxu0 %v351
    %1051 = vmatpush1.msra.mxu0 %v350
    %1052 = vmatprep.subr.mxu0 %v354
    %1053 = vmatpush1.msra.mxu0 %v353
    %1054 = vmatprep.subr.mxu0 %v357
    %1055 = vmatpush1.msra.mxu0 %v356
    %1056 = vmatprep.subr.mxu0 %v360
    %1057 = vmatpush1.msra.mxu0 %v359
    %1058 = vmatprep.subr.mxu0 %v363
    %1059 = vmatpush1.msra.mxu0 %v362
    %1060 = vmatprep.subr.mxu0 %v366
    %1061 = vmatpush1.msra.mxu0 %v365
    %1062 = vmatprep.subr.mxu0 %v369
    %1063 = vmatpush1.msra.mxu0 %v368
    %1064 = vmatprep.subr.mxu0 %v372
    %1065 = vmatpush1.msra.mxu0 %v371
    %1066 = vmatprep.subr.mxu0 %v375
    %1067 = vmatpush1.msra.mxu0 %v374
    %1068 = vmatprep.subr.mxu0 0.0
    %1069 = vmatpush1.msra.mxu0 0.0
    %1070 = vmatprep.subr.mxu0 0.0
    %1071 = vmatpush1.msra.mxu0 0.0
    %1072 = vmatprep.subr.mxu0 0.0
    %1073 = vmatpush1.msra.mxu0 0.0
    %1074 = vmatprep.subr.mxu0 0.0
    %1075 = vmatpush1.msra.mxu0 0.0
    %1076 = vmatprep.subr.mxu0 0.0
    %1077 = vmatpush1.msra.mxu0 0.0
    %1078 = vmatprep.subr.mxu0 0.0
    %1079 = vmatpush1.msra.mxu0 0.0
    %1080 = vmatprep.subr.mxu0 0.0
    %1081 = vmatpush1.msra.mxu0 0.0
    %1082 = vmatprep.subr.mxu0 0.0
    %1083 = vmatpush1.msra.mxu0 0.0
    %1084 = vmatprep.subr.mxu0 0.0
    %1085 = vmatpush1.msra.mxu0 0.0
    %1086 = vmatprep.subr.mxu0 0.0
    %1087 = vmatpush1.msra.mxu0 0.0
    %1088 = vmatprep.subr.mxu0 0.0
    %1089 = vmatpush1.msra.mxu0 0.0
    %1090 = vmatprep.subr.mxu0 0.0
    %1091 = vmatpush1.msra.mxu0 0.0
    %1092 = vmatprep.subr.mxu0 0.0
    %1093 = vmatpush1.msra.mxu0 0.0
    %1094 = vmatprep.subr.mxu0 0.0
    %1095 = vmatpush1.msra.mxu0 0.0
    %1096 = vmatprep.subr.mxu0 0.0
    %1097 = vmatpush1.msra.mxu0 0.0
    %1098 = vmatprep.subr.mxu0 0.0
    %1099 = vmatpush1.msra.mxu0 0.0
    %1100 = vmatprep.mubr.f32.mxu0 0.0
    %1101 = vmatmul.mubr.f32.gmra.mrb[0].mxu0 %v1035
    %v1102 = vpop.f32.mrb[0].mxu0
    %v1103 = vadd.f32 0.0, %v1102
    %v1104 = vpop.f32.mrb[0].mxu0
    %v1105 = vadd.f32 0.0, %v1104
    %1106 = vdwg.mxu0
    %1107 = vmatprep.subr.mxu0 0.0
    %1108 = vmatpush1.msra.mxu0 %v331
    %1109 = vmatprep.subr.mxu0 0.0
    %1110 = vmatpush1.msra.mxu0 %v334
    %1111 = vmatprep.subr.mxu0 0.0
    %1112 = vmatpush1.msra.mxu0 %v337
    %1113 = vmatprep.subr.mxu0 0.0
    %1114 = vmatpush1.msra.mxu0 %v340
    %1115 = vmatprep.subr.mxu0 0.0
    %1116 = vmatpush1.msra.mxu0 %v343
    %1117 = vmatprep.subr.mxu0 0.0
    %1118 = vmatpush1.msra.mxu0 %v346
    %1119 = vmatprep.subr.mxu0 0.0
    %1120 = vmatpush1.msra.mxu0 %v349
    %1121 = vmatprep.subr.mxu0 0.0
    %1122 = vmatpush1.msra.mxu0 %v352
    %1123 = vmatprep.subr.mxu0 0.0
    %1124 = vmatpush1.msra.mxu0 %v355
    %1125 = vmatprep.subr.mxu0 0.0
    %1126 = vmatpush1.msra.mxu0 %v358
    %1127 = vmatprep.subr.mxu0 0.0
    %1128 = vmatpush1.msra.mxu0 %v361
    %1129 = vmatprep.subr.mxu0 0.0
    %1130 = vmatpush1.msra.mxu0 %v364
    %1131 = vmatprep.subr.mxu0 0.0
    %1132 = vmatpush1.msra.mxu0 %v367
    %1133 = vmatprep.subr.mxu0 0.0
    %1134 = vmatpush1.msra.mxu0 %v370
    %1135 = vmatprep.subr.mxu0 0.0
    %1136 = vmatpush1.msra.mxu0 %v373
    %1137 = vmatprep.subr.mxu0 0.0
    %1138 = vmatpush1.msra.mxu0 %v376
    %1139 = vmatprep.subr.mxu0 0.0
    %1140 = vmatpush1.msra.mxu0 0.0
    %1141 = vmatprep.subr.mxu0 0.0
    %1142 = vmatpush1.msra.mxu0 0.0
    %1143 = vmatprep.subr.mxu0 0.0
    %1144 = vmatpush1.msra.mxu0 0.0
    %1145 = vmatprep.subr.mxu0 0.0
    %1146 = vmatpush1.msra.mxu0 0.0
    %1147 = vmatprep.subr.mxu0 0.0
    %1148 = vmatpush1.msra.mxu0 0.0
    %1149 = vmatprep.subr.mxu0 0.0
    %1150 = vmatpush1.msra.mxu0 0.0
    %1151 = vmatprep.subr.mxu0 0.0
    %1152 = vmatpush1.msra.mxu0 0.0
    %1153 = vmatprep.subr.mxu0 0.0
    %1154 = vmatpush1.msra.mxu0 0.0
    %1155 = vmatprep.subr.mxu0 0.0
    %1156 = vmatpush1.msra.mxu0 0.0
    %1157 = vmatprep.subr.mxu0 0.0
    %1158 = vmatpush1.msra.mxu0 0.0
    %1159 = vmatprep.subr.mxu0 0.0
    %1160 = vmatpush1.msra.mxu0 0.0
    %1161 = vmatprep.subr.mxu0 0.0
    %1162 = vmatpush1.msra.mxu0 0.0
    %1163 = vmatprep.subr.mxu0 0.0
    %1164 = vmatpush1.msra.mxu0 0.0
    %1165 = vmatprep.subr.mxu0 0.0
    %1166 = vmatpush1.msra.mxu0 0.0
    %1167 = vmatprep.subr.mxu0 0.0
    %1168 = vmatpush1.msra.mxu0 0.0
    %1169 = vmatprep.subr.mxu0 0.0
    %1170 = vmatpush1.msra.mxu0 0.0
    %1171 = vmatprep.mubr.f32.mxu0 0.0
    %1172 = vmatmul.mubr.f32.gmra.mrb[0].mxu0 %v1035
    %v1173 = vpop.f32.mrb[0].mxu0
    %v1174 = vadd.f32 0.0, %v1173
    %v1175 = vpop.f32.mrb[0].mxu0
    %1176 = vdwg.mxu0
    %v1177 = vadd.f32 %v202, %v1103
    %v1178 = vxor.u32 %v1177, 2147483648
    %v1179 = vmul.f32 %v1178, 1.442695
    %v1180 = vpow.pop %v1179
    %v1181 = vadd.f32 %v1180, 1.0
    %v1182 = vrcp.pop %v1181
    %v1183 = vmul.f32 1.0, %v1182
    %v1184 = vadd.f32 %v204, %v1105
    %v1185 = vxor.u32 %v1184, 2147483648
    %v1186 = vmul.f32 %v1185, 1.442695
    %v1187 = vpow.pop %v1186
    %v1188 = vadd.f32 %v1187, 1.0
    %v1189 = vrcp.pop %v1188
    %v1190 = vmul.f32 1.0, %v1189
    %v1191 = vadd.f32 %v1174, %v537
    %v1192 = vmul.f32 %v1183, %v1191
    %v1193 = vadd.f32 %v311, %v1192
    %v1194 = vtanh.pop %v1193
    %v1195 = vsub.f32 1.0, %v1190
    %v1196 = vmul.f32 %v1195, %v1194
    %v1197 = vmul.f32 %v1190, %v1035
    %v1198 = vadd.f32 %v1196, %v1197
    %1199 = vmatprep.subr.mxu0 %v330
    %1200 = vmatpush1.msra.mxu0 %v329
    %1201 = vmatprep.subr.mxu0 %v333
    %1202 = vmatpush1.msra.mxu0 %v332
    %1203 = vmatprep.subr.mxu0 %v336
    %1204 = vmatpush1.msra.mxu0 %v335
    %1205 = vmatprep.subr.mxu0 %v339
    %1206 = vmatpush1.msra.mxu0 %v338
    %1207 = vmatprep.subr.mxu0 %v342
    %1208 = vmatpush1.msra.mxu0 %v341
    %1209 = vmatprep.subr.mxu0 %v345
    %1210 = vmatpush1.msra.mxu0 %v344
    %1211 = vmatprep.subr.mxu0 %v348
    %1212 = vmatpush1.msra.mxu0 %v347
    %1213 = vmatprep.subr.mxu0 %v351
    %1214 = vmatpush1.msra.mxu0 %v350
    %1215 = vmatprep.subr.mxu0 %v354
    %1216 = vmatpush1.msra.mxu0 %v353
    %1217 = vmatprep.subr.mxu0 %v357
    %1218 = vmatpush1.msra.mxu0 %v356
    %1219 = vmatprep.subr.mxu0 %v360
    %1220 = vmatpush1.msra.mxu0 %v359
    %1221 = vmatprep.subr.mxu0 %v363
    %1222 = vmatpush1.msra.mxu0 %v362
    %1223 = vmatprep.subr.mxu0 %v366
    %1224 = vmatpush1.msra.mxu0 %v365
    %1225 = vmatprep.subr.mxu0 %v369
    %1226 = vmatpush1.msra.mxu0 %v368
    %1227 = vmatprep.subr.mxu0 %v372
    %1228 = vmatpush1.msra.mxu0 %v371
    %1229 = vmatprep.subr.mxu0 %v375
    %1230 = vmatpush1.msra.mxu0 %v374
    %1231 = vmatprep.subr.mxu0 0.0
    %1232 = vmatpush1.msra.mxu0 0.0
    %1233 = vmatprep.subr.mxu0 0.0
    %1234 = vmatpush1.msra.mxu0 0.0
    %1235 = vmatprep.subr.mxu0 0.0
    %1236 = vmatpush1.msra.mxu0 0.0
    %1237 = vmatprep.subr.mxu0 0.0
    %1238 = vmatpush1.msra.mxu0 0.0
    %1239 = vmatprep.subr.mxu0 0.0
    %1240 = vmatpush1.msra.mxu0 0.0
    %1241 = vmatprep.subr.mxu0 0.0
    %1242 = vmatpush1.msra.mxu0 0.0
    %1243 = vmatprep.subr.mxu0 0.0
    %1244 = vmatpush1.msra.mxu0 0.0
    %1245 = vmatprep.subr.mxu0 0.0
    %1246 = vmatpush1.msra.mxu0 0.0
    %1247 = vmatprep.subr.mxu0 0.0
    %1248 = vmatpush1.msra.mxu0 0.0
    %1249 = vmatprep.subr.mxu0 0.0
    %1250 = vmatpush1.msra.mxu0 0.0
    %1251 = vmatprep.subr.mxu0 0.0
    %1252 = vmatpush1.msra.mxu0 0.0
    %1253 = vmatprep.subr.mxu0 0.0
    %1254 = vmatpush1.msra.mxu0 0.0
    %1255 = vmatprep.subr.mxu0 0.0
    %1256 = vmatpush1.msra.mxu0 0.0
    %1257 = vmatprep.subr.mxu0 0.0
    %1258 = vmatpush1.msra.mxu0 0.0
    %1259 = vmatprep.subr.mxu0 0.0
    %1260 = vmatpush1.msra.mxu0 0.0
    %1261 = vmatprep.subr.mxu0 0.0
    %1262 = vmatpush1.msra.mxu0 0.0
    %1263 = vmatprep.mubr.f32.mxu0 0.0
    %1264 = vmatmul.mubr.f32.gmra.mrb[0].mxu0 %v1198
    %v1265 = vpop.f32.mrb[0].mxu0
    %v1266 = vadd.f32 0.0, %v1265
    %v1267 = vpop.f32.mrb[0].mxu0
    %v1268 = vadd.f32 0.0, %v1267
    %1269 = vdwg.mxu0
    %1270 = vmatprep.subr.mxu0 0.0
    %1271 = vmatpush1.msra.mxu0 %v331
    %1272 = vmatprep.subr.mxu0 0.0
    %1273 = vmatpush1.msra.mxu0 %v334
    %1274 = vmatprep.subr.mxu0 0.0
    %1275 = vmatpush1.msra.mxu0 %v337
    %1276 = vmatprep.subr.mxu0 0.0
    %1277 = vmatpush1.msra.mxu0 %v340
    %1278 = vmatprep.subr.mxu0 0.0
    %1279 = vmatpush1.msra.mxu0 %v343
    %1280 = vmatprep.subr.mxu0 0.0
    %1281 = vmatpush1.msra.mxu0 %v346
    %1282 = vmatprep.subr.mxu0 0.0
    %1283 = vmatpush1.msra.mxu0 %v349
    %1284 = vmatprep.subr.mxu0 0.0
    %1285 = vmatpush1.msra.mxu0 %v352
    %1286 = vmatprep.subr.mxu0 0.0
    %1287 = vmatpush1.msra.mxu0 %v355
    %1288 = vmatprep.subr.mxu0 0.0
    %1289 = vmatpush1.msra.mxu0 %v358
    %1290 = vmatprep.subr.mxu0 0.0
    %1291 = vmatpush1.msra.mxu0 %v361
    %1292 = vmatprep.subr.mxu0 0.0
    %1293 = vmatpush1.msra.mxu0 %v364
    %1294 = vmatprep.subr.mxu0 0.0
    %1295 = vmatpush1.msra.mxu0 %v367
    %1296 = vmatprep.subr.mxu0 0.0
    %1297 = vmatpush1.msra.mxu0 %v370
    %1298 = vmatprep.subr.mxu0 0.0
    %1299 = vmatpush1.msra.mxu0 %v373
    %1300 = vmatprep.subr.mxu0 0.0
    %1301 = vmatpush1.msra.mxu0 %v376
    %1302 = vmatprep.subr.mxu0 0.0
    %1303 = vmatpush1.msra.mxu0 0.0
    %1304 = vmatprep.subr.mxu0 0.0
    %1305 = vmatpush1.msra.mxu0 0.0
    %1306 = vmatprep.subr.mxu0 0.0
    %1307 = vmatpush1.msra.mxu0 0.0
    %1308 = vmatprep.subr.mxu0 0.0
    %1309 = vmatpush1.msra.mxu0 0.0
    %1310 = vmatprep.subr.mxu0 0.0
    %1311 = vmatpush1.msra.mxu0 0.0
    %1312 = vmatprep.subr.mxu0 0.0
    %1313 = vmatpush1.msra.mxu0 0.0
    %1314 = vmatprep.subr.mxu0 0.0
    %1315 = vmatpush1.msra.mxu0 0.0
    %1316 = vmatprep.subr.mxu0 0.0
    %1317 = vmatpush1.msra.mxu0 0.0
    %1318 = vmatprep.subr.mxu0 0.0
    %1319 = vmatpush1.msra.mxu0 0.0
    %1320 = vmatprep.subr.mxu0 0.0
    %1321 = vmatpush1.msra.mxu0 0.0
    %1322 = vmatprep.subr.mxu0 0.0
    %1323 = vmatpush1.msra.mxu0 0.0
    %1324 = vmatprep.subr.mxu0 0.0
    %1325 = vmatpush1.msra.mxu0 0.0
    %1326 = vmatprep.subr.mxu0 0.0
    %1327 = vmatpush1.msra.mxu0 0.0
    %1328 = vmatprep.subr.mxu0 0.0
    %1329 = vmatpush1.msra.mxu0 0.0
    %1330 = vmatprep.subr.mxu0 0.0
    %1331 = vmatpush1.msra.mxu0 0.0
    %1332 = vmatprep.subr.mxu0 0.0
    %1333 = vmatpush1.msra.mxu0 0.0
    %1334 = vmatprep.mubr.f32.mxu0 0.0
    %1335 = vmatmul.mubr.f32.gmra.mrb[0].mxu0 %v1198
    %v1336 = vpop.f32.mrb[0].mxu0
    %v1337 = vadd.f32 0.0, %v1336
    %v1338 = vpop.f32.mrb[0].mxu0
    %1339 = vdwg.mxu0
    %v1340 = vadd.f32 %v208, %v1266
    %v1341 = vxor.u32 %v1340, 2147483648
    %v1342 = vmul.f32 %v1341, 1.442695
    %v1343 = vpow.pop %v1342
    %v1344 = vadd.f32 %v1343, 1.0
    %v1345 = vrcp.pop %v1344
    %v1346 = vmul.f32 1.0, %v1345
    %v1347 = vadd.f32 %v210, %v1268
    %v1348 = vxor.u32 %v1347, 2147483648
    %v1349 = vmul.f32 %v1348, 1.442695
    %v1350 = vpow.pop %v1349
    %v1351 = vadd.f32 %v1350, 1.0
    %v1352 = vrcp.pop %v1351
    %v1353 = vmul.f32 1.0, %v1352
    %v1354 = vadd.f32 %v1337, %v537
    %v1355 = vmul.f32 %v1346, %v1354
    %v1356 = vadd.f32 %v316, %v1355
    %v1357 = vtanh.pop %v1356
    %v1358 = vsub.f32 1.0, %v1353
    %v1359 = vmul.f32 %v1358, %v1357
    %v1360 = vmul.f32 %v1353, %v1198
    %v1361 = vadd.f32 %v1359, %v1360
    %1362 = vmatprep.subr.mxu0 %v330
    %1363 = vmatpush1.msra.mxu0 %v329
    %1364 = vmatprep.subr.mxu0 %v333
    %1365 = vmatpush1.msra.mxu0 %v332
    %1366 = vmatprep.subr.mxu0 %v336
    %1367 = vmatpush1.msra.mxu0 %v335
    %1368 = vmatprep.subr.mxu0 %v339
    %1369 = vmatpush1.msra.mxu0 %v338
    %1370 = vmatprep.subr.mxu0 %v342
    %1371 = vmatpush1.msra.mxu0 %v341
    %1372 = vmatprep.subr.mxu0 %v345
    %1373 = vmatpush1.msra.mxu0 %v344
    %1374 = vmatprep.subr.mxu0 %v348
    %1375 = vmatpush1.msra.mxu0 %v347
    %1376 = vmatprep.subr.mxu0 %v351
    %1377 = vmatpush1.msra.mxu0 %v350
    %1378 = vmatprep.subr.mxu0 %v354
    %1379 = vmatpush1.msra.mxu0 %v353
    %1380 = vmatprep.subr.mxu0 %v357
    %1381 = vmatpush1.msra.mxu0 %v356
    %1382 = vmatprep.subr.mxu0 %v360
    %1383 = vmatpush1.msra.mxu0 %v359
    %1384 = vmatprep.subr.mxu0 %v363
    %1385 = vmatpush1.msra.mxu0 %v362
    %1386 = vmatprep.subr.mxu0 %v366
    %1387 = vmatpush1.msra.mxu0 %v365
    %1388 = vmatprep.subr.mxu0 %v369
    %1389 = vmatpush1.msra.mxu0 %v368
    %1390 = vmatprep.subr.mxu0 %v372
    %1391 = vmatpush1.msra.mxu0 %v371
    %1392 = vmatprep.subr.mxu0 %v375
    %1393 = vmatpush1.msra.mxu0 %v374
    %1394 = vmatprep.subr.mxu0 0.0
    %1395 = vmatpush1.msra.mxu0 0.0
    %1396 = vmatprep.subr.mxu0 0.0
    %1397 = vmatpush1.msra.mxu0 0.0
    %1398 = vmatprep.subr.mxu0 0.0
    %1399 = vmatpush1.msra.mxu0 0.0
    %1400 = vmatprep.subr.mxu0 0.0
    %1401 = vmatpush1.msra.mxu0 0.0
    %1402 = vmatprep.subr.mxu0 0.0
    %1403 = vmatpush1.msra.mxu0 0.0
    %1404 = vmatprep.subr.mxu0 0.0
    %1405 = vmatpush1.msra.mxu0 0.0
    %1406 = vmatprep.subr.mxu0 0.0
    %1407 = vmatpush1.msra.mxu0 0.0
    %1408 = vmatprep.subr.mxu0 0.0
    %1409 = vmatpush1.msra.mxu0 0.0
    %1410 = vmatprep.subr.mxu0 0.0
    %1411 = vmatpush1.msra.mxu0 0.0
    %1412 = vmatprep.subr.mxu0 0.0
    %1413 = vmatpush1.msra.mxu0 0.0
    %1414 = vmatprep.subr.mxu0 0.0
    %1415 = vmatpush1.msra.mxu0 0.0
    %1416 = vmatprep.subr.mxu0 0.0
    %1417 = vmatpush1.msra.mxu0 0.0
    %1418 = vmatprep.subr.mxu0 0.0
    %1419 = vmatpush1.msra.mxu0 0.0
    %1420 = vmatprep.subr.mxu0 0.0
    %1421 = vmatpush1.msra.mxu0 0.0
    %1422 = vmatprep.subr.mxu0 0.0
    %1423 = vmatpush1.msra.mxu0 0.0
    %1424 = vmatprep.subr.mxu0 0.0
    %1425 = vmatpush1.msra.mxu0 0.0
    %1426 = vmatprep.mubr.f32.mxu0 0.0
    %1427 = vmatmul.mubr.f32.gmra.mrb[0].mxu0 %v1361
    %v1428 = vpop.f32.mrb[0].mxu0
    %v1429 = vadd.f32 0.0, %v1428
    %v1430 = vpop.f32.mrb[0].mxu0
    %v1431 = vadd.f32 0.0, %v1430
    %1432 = vdwg.mxu0
    %1433 = vmatprep.subr.mxu0 0.0
    %1434 = vmatpush1.msra.mxu0 %v331
    %1435 = vmatprep.subr.mxu0 0.0
    %1436 = vmatpush1.msra.mxu0 %v334
    %1437 = vmatprep.subr.mxu0 0.0
    %1438 = vmatpush1.msra.mxu0 %v337
    %1439 = vmatprep.subr.mxu0 0.0
    %1440 = vmatpush1.msra.mxu0 %v340
    %1441 = vmatprep.subr.mxu0 0.0
    %1442 = vmatpush1.msra.mxu0 %v343
    %1443 = vmatprep.subr.mxu0 0.0
    %1444 = vmatpush1.msra.mxu0 %v346
    %1445 = vmatprep.subr.mxu0 0.0
    %1446 = vmatpush1.msra.mxu0 %v349
    %1447 = vmatprep.subr.mxu0 0.0
    %1448 = vmatpush1.msra.mxu0 %v352
    %1449 = vmatprep.subr.mxu0 0.0
    %1450 = vmatpush1.msra.mxu0 %v355
    %1451 = vmatprep.subr.mxu0 0.0
    %1452 = vmatpush1.msra.mxu0 %v358
    %1453 = vmatprep.subr.mxu0 0.0
    %1454 = vmatpush1.msra.mxu0 %v361
    %1455 = vmatprep.subr.mxu0 0.0
    %1456 = vmatpush1.msra.mxu0 %v364
    %1457 = vmatprep.subr.mxu0 0.0
    %1458 = vmatpush1.msra.mxu0 %v367
    %1459 = vmatprep.subr.mxu0 0.0
    %1460 = vmatpush1.msra.mxu0 %v370
    %1461 = vmatprep.subr.mxu0 0.0
    %1462 = vmatpush1.msra.mxu0 %v373
    %1463 = vmatprep.subr.mxu0 0.0
    %1464 = vmatpush1.msra.mxu0 %v376
    %1465 = vmatprep.subr.mxu0 0.0
    %1466 = vmatpush1.msra.mxu0 0.0
    %1467 = vmatprep.subr.mxu0 0.0
    %1468 = vmatpush1.msra.mxu0 0.0
    %1469 = vmatprep.subr.mxu0 0.0
    %1470 = vmatpush1.msra.mxu0 0.0
    %1471 = vmatprep.subr.mxu0 0.0
    %1472 = vmatpush1.msra.mxu0 0.0
    %1473 = vmatprep.subr.mxu0 0.0
    %1474 = vmatpush1.msra.mxu0 0.0
    %1475 = vmatprep.subr.mxu0 0.0
    %1476 = vmatpush1.msra.mxu0 0.0
    %1477 = vmatprep.subr.mxu0 0.0
    %1478 = vmatpush1.msra.mxu0 0.0
    %1479 = vmatprep.subr.mxu0 0.0
    %1480 = vmatpush1.msra.mxu0 0.0
    %1481 = vmatprep.subr.mxu0 0.0
    %1482 = vmatpush1.msra.mxu0 0.0
    %1483 = vmatprep.subr.mxu0 0.0
    %1484 = vmatpush1.msra.mxu0 0.0
    %1485 = vmatprep.subr.mxu0 0.0
    %1486 = vmatpush1.msra.mxu0 0.0
    %1487 = vmatprep.subr.mxu0 0.0
    %1488 = vmatpush1.msra.mxu0 0.0
    %1489 = vmatprep.subr.mxu0 0.0
    %1490 = vmatpush1.msra.mxu0 0.0
    %1491 = vmatprep.subr.mxu0 0.0
    %1492 = vmatpush1.msra.mxu0 0.0
    %1493 = vmatprep.subr.mxu0 0.0
    %1494 = vmatpush1.msra.mxu0 0.0
    %1495 = vmatprep.subr.mxu0 0.0
    %1496 = vmatpush1.msra.mxu0 0.0
    %1497 = vmatprep.mubr.f32.mxu0 0.0
    %1498 = vmatmul.mubr.f32.gmra.mrb[0].mxu0 %v1361
    %v1499 = vpop.f32.mrb[0].mxu0
    %v1500 = vadd.f32 0.0, %v1499
    %v1501 = vpop.f32.mrb[0].mxu0
    %1502 = vdwg.mxu0
    %v1503 = vadd.f32 %v214, %v1429
    %v1504 = vxor.u32 %v1503, 2147483648
    %v1505 = vmul.f32 %v1504, 1.442695
    %v1506 = vpow.pop %v1505
    %v1507 = vadd.f32 %v1506, 1.0
    %v1508 = vrcp.pop %v1507
    %v1509 = vmul.f32 1.0, %v1508
    %v1510 = vadd.f32 %v216, %v1431
    %v1511 = vxor.u32 %v1510, 2147483648
    %v1512 = vmul.f32 %v1511, 1.442695
    %v1513 = vpow.pop %v1512
    %v1514 = vadd.f32 %v1513, 1.0
    %v1515 = vrcp.pop %v1514
    %v1516 = vmul.f32 1.0, %v1515
    %v1517 = vadd.f32 %v1500, %v537
    %v1518 = vmul.f32 %v1509, %v1517
    %v1519 = vadd.f32 %v321, %v1518
    %v1520 = vtanh.pop %v1519
    %v1521 = vsub.f32 1.0, %v1516
    %v1522 = vmul.f32 %v1521, %v1520
    %v1523 = vmul.f32 %v1516, %v1361
    %v1524 = vadd.f32 %v1522, %v1523
    %1525 = vmatprep.subr.mxu0 %v330
    %1526 = vmatpush1.msra.mxu0 %v329
    %1527 = vmatprep.subr.mxu0 %v333
    %1528 = vmatpush1.msra.mxu0 %v332
    %1529 = vmatprep.subr.mxu0 %v336
    %1530 = vmatpush1.msra.mxu0 %v335
    %1531 = vmatprep.subr.mxu0 %v339
    %1532 = vmatpush1.msra.mxu0 %v338
    %1533 = vmatprep.subr.mxu0 %v342
    %1534 = vmatpush1.msra.mxu0 %v341
    %1535 = vmatprep.subr.mxu0 %v345
    %1536 = vmatpush1.msra.mxu0 %v344
    %1537 = vmatprep.subr.mxu0 %v348
    %1538 = vmatpush1.msra.mxu0 %v347
    %1539 = vmatprep.subr.mxu0 %v351
    %1540 = vmatpush1.msra.mxu0 %v350
    %1541 = vmatprep.subr.mxu0 %v354
    %1542 = vmatpush1.msra.mxu0 %v353
    %1543 = vmatprep.subr.mxu0 %v357
    %1544 = vmatpush1.msra.mxu0 %v356
    %1545 = vmatprep.subr.mxu0 %v360
    %1546 = vmatpush1.msra.mxu0 %v359
    %1547 = vmatprep.subr.mxu0 %v363
    %1548 = vmatpush1.msra.mxu0 %v362
    %1549 = vmatprep.subr.mxu0 %v366
    %1550 = vmatpush1.msra.mxu0 %v365
    %1551 = vmatprep.subr.mxu0 %v369
    %1552 = vmatpush1.msra.mxu0 %v368
    %1553 = vmatprep.subr.mxu0 %v372
    %1554 = vmatpush1.msra.mxu0 %v371
    %1555 = vmatprep.subr.mxu0 %v375
    %1556 = vmatpush1.msra.mxu0 %v374
    %1557 = vmatprep.subr.mxu0 0.0
    %1558 = vmatpush1.msra.mxu0 0.0
    %1559 = vmatprep.subr.mxu0 0.0
    %1560 = vmatpush1.msra.mxu0 0.0
    %1561 = vmatprep.subr.mxu0 0.0
    %1562 = vmatpush1.msra.mxu0 0.0
    %1563 = vmatprep.subr.mxu0 0.0
    %1564 = vmatpush1.msra.mxu0 0.0
    %1565 = vmatprep.subr.mxu0 0.0
    %1566 = vmatpush1.msra.mxu0 0.0
    %1567 = vmatprep.subr.mxu0 0.0
    %1568 = vmatpush1.msra.mxu0 0.0
    %1569 = vmatprep.subr.mxu0 0.0
    %1570 = vmatpush1.msra.mxu0 0.0
    %1571 = vmatprep.subr.mxu0 0.0
    %1572 = vmatpush1.msra.mxu0 0.0
    %1573 = vmatprep.subr.mxu0 0.0
    %1574 = vmatpush1.msra.mxu0 0.0
    %1575 = vmatprep.subr.mxu0 0.0
    %1576 = vmatpush1.msra.mxu0 0.0
    %1577 = vmatprep.subr.mxu0 0.0
    %1578 = vmatpush1.msra.mxu0 0.0
    %1579 = vmatprep.subr.mxu0 0.0
    %1580 = vmatpush1.msra.mxu0 0.0
    %1581 = vmatprep.subr.mxu0 0.0
    %1582 = vmatpush1.msra.mxu0 0.0
    %1583 = vmatprep.subr.mxu0 0.0
    %1584 = vmatpush1.msra.mxu0 0.0
    %1585 = vmatprep.subr.mxu0 0.0
    %1586 = vmatpush1.msra.mxu0 0.0
    %1587 = vmatprep.subr.mxu0 0.0
    %1588 = vmatpush1.msra.mxu0 0.0
    %1589 = vmatprep.mubr.f32.mxu0 0.0
    %1590 = vmatmul.mubr.f32.gmra.mrb[0].mxu0 %v1524
    %v1591 = vpop.f32.mrb[0].mxu0
    %v1592 = vadd.f32 0.0, %v1591
    %v1593 = vpop.f32.mrb[0].mxu0
    %v1594 = vadd.f32 0.0, %v1593
    %1595 = vdwg.mxu0
    %1596 = vmatprep.subr.mxu0 0.0
    %1597 = vmatpush1.msra.mxu0 %v331
    %1598 = vmatprep.subr.mxu0 0.0
    %1599 = vmatpush1.msra.mxu0 %v334
    %1600 = vmatprep.subr.mxu0 0.0
    %1601 = vmatpush1.msra.mxu0 %v337
    %1602 = vmatprep.subr.mxu0 0.0
    %1603 = vmatpush1.msra.mxu0 %v340
    %1604 = vmatprep.subr.mxu0 0.0
    %1605 = vmatpush1.msra.mxu0 %v343
    %1606 = vmatprep.subr.mxu0 0.0
    %1607 = vmatpush1.msra.mxu0 %v346
    %1608 = vmatprep.subr.mxu0 0.0
    %1609 = vmatpush1.msra.mxu0 %v349
    %1610 = vmatprep.subr.mxu0 0.0
    %1611 = vmatpush1.msra.mxu0 %v352
    %1612 = vmatprep.subr.mxu0 0.0
    %1613 = vmatpush1.msra.mxu0 %v355
    %1614 = vmatprep.subr.mxu0 0.0
    %1615 = vmatpush1.msra.mxu0 %v358
    %1616 = vmatprep.subr.mxu0 0.0
    %1617 = vmatpush1.msra.mxu0 %v361
    %1618 = vmatprep.subr.mxu0 0.0
    %1619 = vmatpush1.msra.mxu0 %v364
    %1620 = vmatprep.subr.mxu0 0.0
    %1621 = vmatpush1.msra.mxu0 %v367
    %1622 = vmatprep.subr.mxu0 0.0
    %1623 = vmatpush1.msra.mxu0 %v370
    %1624 = vmatprep.subr.mxu0 0.0
    %1625 = vmatpush1.msra.mxu0 %v373
    %1626 = vmatprep.subr.mxu0 0.0
    %1627 = vmatpush1.msra.mxu0 %v376
    %1628 = vmatprep.subr.mxu0 0.0
    %1629 = vmatpush1.msra.mxu0 0.0
    %1630 = vmatprep.subr.mxu0 0.0
    %1631 = vmatpush1.msra.mxu0 0.0
    %1632 = vmatprep.subr.mxu0 0.0
    %1633 = vmatpush1.msra.mxu0 0.0
    %1634 = vmatprep.subr.mxu0 0.0
    %1635 = vmatpush1.msra.mxu0 0.0
    %1636 = vmatprep.subr.mxu0 0.0
    %1637 = vmatpush1.msra.mxu0 0.0
    %1638 = vmatprep.subr.mxu0 0.0
    %1639 = vmatpush1.msra.mxu0 0.0
    %1640 = vmatprep.subr.mxu0 0.0
    %1641 = vmatpush1.msra.mxu0 0.0
    %1642 = vmatprep.subr.mxu0 0.0
    %1643 = vmatpush1.msra.mxu0 0.0
    %1644 = vmatprep.subr.mxu0 0.0
    %1645 = vmatpush1.msra.mxu0 0.0
    %1646 = vmatprep.subr.mxu0 0.0
    %1647 = vmatpush1.msra.mxu0 0.0
    %1648 = vmatprep.subr.mxu0 0.0
    %1649 = vmatpush1.msra.mxu0 0.0
    %1650 = vmatprep.subr.mxu0 0.0
    %1651 = vmatpush1.msra.mxu0 0.0
    %1652 = vmatprep.subr.mxu0 0.0
    %1653 = vmatpush1.msra.mxu0 0.0
    %1654 = vmatprep.subr.mxu0 0.0
    %1655 = vmatpush1.msra.mxu0 0.0
    %1656 = vmatprep.subr.mxu0 0.0
    %1657 = vmatpush1.msra.mxu0 0.0
    %1658 = vmatprep.subr.mxu0 0.0
    %1659 = vmatpush1.msra.mxu0 0.0
    %1660 = vmatprep.mubr.f32.mxu0 0.0
    %1661 = vmatmul.mubr.f32.gmra.mrb[0].mxu0 %v1524
    %v1662 = vpop.f32.mrb[0].mxu0
    %v1663 = vadd.f32 0.0, %v1662
    %v1664 = vpop.f32.mrb[0].mxu0
    %1665 = vdwg.mxu0
    %v1666 = vadd.f32 %v220, %v1592
    %v1667 = vxor.u32 %v1666, 2147483648
    %v1668 = vmul.f32 %v1667, 1.442695
    %v1669 = vpow.pop %v1668
    %v1670 = vadd.f32 %v1669, 1.0
    %v1671 = vrcp.pop %v1670
    %v1672 = vmul.f32 1.0, %v1671
    %v1673 = vadd.f32 %v222, %v1594
    %v1674 = vxor.u32 %v1673, 2147483648
    %v1675 = vmul.f32 %v1674, 1.442695
    %v1676 = vpow.pop %v1675
    %v1677 = vadd.f32 %v1676, 1.0
    %v1678 = vrcp.pop %v1677
    %v1679 = vmul.f32 1.0, %v1678
    %v1680 = vadd.f32 %v1663, %v537
    %v1681 = vmul.f32 %v1672, %v1680
    %v1682 = vadd.f32 %v326, %v1681
    %v1683 = vtanh.pop %v1682
    %v1684 = vsub.f32 1.0, %v1679
    %v1685 = vmul.f32 %v1684, %v1683
    %v1686 = vmul.f32 %v1679, %v1524
    %v1687 = vadd.f32 %v1685, %v1686
    %v1688 = vld [vmem:[#allocation5] sm:$0xff]
    %v1689 = vld [vmem:[#allocation5 + $0x8] sm:$0xff]
    %v1690 = vld [vmem:[#allocation5 + $0x10] sm:$0xff]
    %v1691 = vld [vmem:[#allocation5 + $0x18] sm:$0xff]
    %v1692 = vld [vmem:[#allocation5 + $0x20] sm:$0xff]
    %v1693 = vld [vmem:[#allocation5 + $0x28] sm:$0xff]
    %v1694 = vld [vmem:[#allocation5 + $0x30] sm:$0xff]
    %v1695 = vld [vmem:[#allocation5 + $0x38] sm:$0xff]
    %v1696 = vld [vmem:[#allocation5 + $0x40] sm:$0xff]
    %v1697 = vld [vmem:[#allocation5 + $0x48] sm:$0xff]
    %v1698 = vld [vmem:[#allocation5 + $0x50] sm:$0xff]
    %v1699 = vld [vmem:[#allocation5 + $0x58] sm:$0xff]
    %v1700 = vld [vmem:[#allocation5 + $0x60] sm:$0xff]
    %v1701 = vld [vmem:[#allocation5 + $0x68] sm:$0xff]
    %v1702 = vld [vmem:[#allocation5 + $0x70] sm:$0xff]
    %v1703 = vld [vmem:[#allocation5 + $0x78] sm:$0xff]
    %v1704 = vld [vmem:[%s6] sm:$0x1]
    %v1706 = vlaneseq
    %v1707 = vshrl.u32 %v1706, 7
    %v1708 = vsub.s32 0, %v1707
    %v1709 = vrot.slane %v1704, %v1708
    %1711 = vmatprep.subr.mxu0 0.0
    %1712 = vmatpush1.msra.mxu0 %v1688
    %1713 = vmatprep.subr.mxu0 0.0
    %1714 = vmatpush1.msra.mxu0 %v1689
    %1715 = vmatprep.subr.mxu0 0.0
    %1716 = vmatpush1.msra.mxu0 %v1690
    %1717 = vmatprep.subr.mxu0 0.0
    %1718 = vmatpush1.msra.mxu0 %v1691
    %1719 = vmatprep.subr.mxu0 0.0
    %1720 = vmatpush1.msra.mxu0 %v1692
    %1721 = vmatprep.subr.mxu0 0.0
    %1722 = vmatpush1.msra.mxu0 %v1693
    %1723 = vmatprep.subr.mxu0 0.0
    %1724 = vmatpush1.msra.mxu0 %v1694
    %1725 = vmatprep.subr.mxu0 0.0
    %1726 = vmatpush1.msra.mxu0 %v1695
    %1727 = vmatprep.subr.mxu0 0.0
    %1728 = vmatpush1.msra.mxu0 %v1696
    %1729 = vmatprep.subr.mxu0 0.0
    %1730 = vmatpush1.msra.mxu0 %v1697
    %1731 = vmatprep.subr.mxu0 0.0
    %1732 = vmatpush1.msra.mxu0 %v1698
    %1733 = vmatprep.subr.mxu0 0.0
    %1734 = vmatpush1.msra.mxu0 %v1699
    %1735 = vmatprep.subr.mxu0 0.0
    %1736 = vmatpush1.msra.mxu0 %v1700
    %1737 = vmatprep.subr.mxu0 0.0
    %1738 = vmatpush1.msra.mxu0 %v1701
    %1739 = vmatprep.subr.mxu0 0.0
    %1740 = vmatpush1.msra.mxu0 %v1702
    %1741 = vmatprep.subr.mxu0 0.0
    %1742 = vmatpush1.msra.mxu0 %v1703
    %1743 = vmatprep.subr.mxu0 0.0
    %1744 = vmatpush1.msra.mxu0 0.0
    %1745 = vmatprep.subr.mxu0 0.0
    %1746 = vmatpush1.msra.mxu0 0.0
    %1747 = vmatprep.subr.mxu0 0.0
    %1748 = vmatpush1.msra.mxu0 0.0
    %1749 = vmatprep.subr.mxu0 0.0
    %1750 = vmatpush1.msra.mxu0 0.0
    %1751 = vmatprep.subr.mxu0 0.0
    %1752 = vmatpush1.msra.mxu0 0.0
    %1753 = vmatprep.subr.mxu0 0.0
    %1754 = vmatpush1.msra.mxu0 0.0
    %1755 = vmatprep.subr.mxu0 0.0
    %1756 = vmatpush1.msra.mxu0 0.0
    %1757 = vmatprep.subr.mxu0 0.0
    %1758 = vmatpush1.msra.mxu0 0.0
    %1759 = vmatprep.subr.mxu0 0.0
    %1760 = vmatpush1.msra.mxu0 0.0
    %1761 = vmatprep.subr.mxu0 0.0
    %1762 = vmatpush1.msra.mxu0 0.0
    %1763 = vmatprep.subr.mxu0 0.0
    %1764 = vmatpush1.msra.mxu0 0.0
    %1765 = vmatprep.subr.mxu0 0.0
    %1766 = vmatpush1.msra.mxu0 0.0
    %1767 = vmatprep.subr.mxu0 0.0
    %1768 = vmatpush1.msra.mxu0 0.0
    %1769 = vmatprep.subr.mxu0 0.0
    %1770 = vmatpush1.msra.mxu0 0.0
    %1771 = vmatprep.subr.mxu0 0.0
    %1772 = vmatpush1.msra.mxu0 0.0
    %1773 = vmatprep.subr.mxu0 0.0
    %1774 = vmatpush1.msra.mxu0 0.0
    %1775 = vmatprep.mubr.f32.mxu0 0.0
    %1776 = vmatmul.mubr.f32.gmra.mrb[0].mxu0 %v546
    %v1777 = vpop.f32.mrb[0].mxu0
    %v1778 = vadd.f32 %v1709, %v1777
    %v1779 = vpop.f32.mrb[0].mxu0
    %1780 = vmatprep.mubr.f32.mxu0 0.0
    %1781 = vmatmul.mubr.f32.gmra.mrb[0].mxu0 %v709
    %v1782 = vpop.f32.mrb[0].mxu0
    %v1783 = vadd.f32 %v1709, %v1782
    %v1784 = vpop.f32.mrb[0].mxu0
    %1785 = vmatprep.mubr.f32.mxu0 0.0
    %1786 = vmatmul.mubr.f32.gmra.mrb[0].mxu0 %v872
    %v1787 = vpop.f32.mrb[0].mxu0
    %v1788 = vadd.f32 %v1709, %v1787
    %v1789 = vpop.f32.mrb[0].mxu0
    %1790 = vmatprep.mubr.f32.mxu0 0.0
    %1791 = vmatmul.mubr.f32.gmra.mrb[0].mxu0 %v1035
    %v1792 = vpop.f32.mrb[0].mxu0
    %v1793 = vadd.f32 %v1709, %v1792
    %v1794 = vpop.f32.mrb[0].mxu0
    %1795 = vmatprep.mubr.f32.mxu0 0.0
    %1796 = vmatmul.mubr.f32.gmra.mrb[0].mxu0 %v1198
    %v1797 = vpop.f32.mrb[0].mxu0
    %v1798 = vadd.f32 %v1709, %v1797
    %v1799 = vpop.f32.mrb[0].mxu0
    %1800 = vmatprep.mubr.f32.mxu0 0.0
    %1801 = vmatmul.mubr.f32.gmra.mrb[0].mxu0 %v1361
    %v1802 = vpop.f32.mrb[0].mxu0
    %v1803 = vadd.f32 %v1709, %v1802
    %v1804 = vpop.f32.mrb[0].mxu0
    %1805 = vmatprep.mubr.f32.mxu0 0.0
    %1806 = vmatmul.mubr.f32.gmra.mrb[0].mxu0 %v1524
    %v1807 = vpop.f32.mrb[0].mxu0
    %v1808 = vadd.f32 %v1709, %v1807
    %v1809 = vpop.f32.mrb[0].mxu0
    %1810 = vmatprep.mubr.f32.mxu0 0.0
    %1811 = vmatmul.mubr.f32.gmra.mrb[0].mxu0 %v1687
    %v1812 = vpop.f32.mrb[0].mxu0
    %v1813 = vadd.f32 %v1709, %v1812
    %v1814 = vpop.f32.mrb[0].mxu0
    %1815 = vdwg.mxu0
    %1816 = vst [vmem:[#allocation7] sm:$0xff] %v1778
    %1817 = vst [vmem:[#allocation7 + $0x8] sm:$0xff] %v1783
    %1818 = vst [vmem:[#allocation7 + $0x10] sm:$0xff] %v1788
    %1819 = vst [vmem:[#allocation7 + $0x18] sm:$0xff] %v1793
    %1820 = vst [vmem:[#allocation7 + $0x20] sm:$0xff] %v1798
    %1821 = vst [vmem:[#allocation7 + $0x28] sm:$0xff] %v1803
    %1822 = vst [vmem:[#allocation7 + $0x30] sm:$0xff] %v1808
    %1823 = vst [vmem:[#allocation7 + $0x38] sm:$0xff] %v1813
    // Predicated region
    $region38: #{tpu_custom_call.1} parent=1 // pred_check
      _
    $region39: #{tpu_custom_call.1} parent=1 // pred_check_branch
      %1825 = sbr.rel (0) target = $region41
    $region40: #{tpu_custom_call.1} parent=1 // pred_region
      %s1827 = ssub.s32 1024, 1024
      %1828 = vsyncadd [#allocation4], %s1827
      %s1829 = sshll.u32 [#allocation7], 4
      %s1830 = int_to_ptr.vmem [resolvable:$true] %s1829
      %1835 = dma.vmem_to_hbm [thread:$0]  %s1830, 1024, %s7, [#allocation4], 128, 128, 8
    $region41: #{tpu_custom_call.1} parent=1 // pred_fallthru
      _
    // Predicated region
    $region42: #{tpu_custom_call.1} parent=1 // pred_check
      _
    $region43: #{tpu_custom_call.1} parent=1 // pred_check_branch
      %1837 = sbr.rel (0) target = $region45
    $region44: #{tpu_custom_call.1} parent=1 // pred_region
      %1838 = dma.done [#allocation4], 1024
    $region45: #{tpu_custom_call.1} parent=1 // pred_fallthru
      _
    %1839 = vsyncpa [#allocation3], 1
    %1840 = vsyncpa [#allocation6], 1
    %1841 = vsyncpa [#allocation4], 1

</llo_original>
